<compile_context>
chip_gen: v7x
topology: tpu7x:2x2x1
jax: 0.10.0
libtpu: 0.0.40
codegen_flags: <defaults>
</compile_context>

<pallas_src>
import functools

import jax
import jax.numpy as jnp
from jax.experimental import pallas as pl
from jax.experimental.pallas import tpu as pltpu

LANE = 128     # lane width; K and Co are padded to multiples of this
LEAK = 0.2
BN_EPS = 1e-5


def _round_up(x, m):
    return (x + m - 1) // m * m


def _k_tile(kp):
    """K tile: >=2 K steps whenever possible so weight DMA pipelines with MXU."""
    for tk in (2048, 1024, 512, 256, 128):
        if kp % tk == 0 and kp // tk >= 2:
            return tk
    return kp


def _c_tile(cp):
    """Column tile: >=2 lane-dense 'parallel' tiles on wide layers (v7x megacore)."""
    if cp >= 512:
        return 256
    return min(cp, 128)


# ---------------------------------------------------------------------------
# Pallas kernels
# ---------------------------------------------------------------------------
def _matmul_leaky_kernel(a_ref, b_ref, o_ref):
    """y = A @ B ; LeakyReLU(0.2) fused in the epilogue (no BN layer)."""
    y = jnp.dot(a_ref[...], b_ref[...], preferred_element_type=jnp.float32)
    o_ref[...] = jnp.where(y > 0, y, LEAK * y).astype(o_ref.dtype)


def _matmul_bn_leaky_kernel(a_ref, b_ref, g_ref, bt_ref, o_ref, acc_ref, *, m_valid):
    """K-tiled matmul with BatchNorm (training batch stats) + LeakyReLU epilogue.

    grid = (C tiles ["parallel"], K tiles ["arbitrary"]).  The f32 accumulator
    holds the whole (padded) batch for this C tile; at the last K step the
    per-channel mean / centered variance are computed from it and the fused
    scale/shift + LeakyReLU are applied in-register before the bf16 store."""
    k = pl.program_id(1)

    @pl.when(k == 0)
    def _():
        acc_ref[...] = jnp.zeros_like(acc_ref)

    acc_ref[...] += jnp.dot(a_ref[...], b_ref[...],
                            preferred_element_type=jnp.float32)

    @pl.when(k == pl.num_programs(1) - 1)
    def _():
        acc = acc_ref[...]                                   # (Mp, tc) f32
        inv_m = jnp.float32(1.0 / m_valid)
        mean = jnp.sum(acc, axis=0, keepdims=True) * inv_m   # pad rows are 0
        centered = acc - mean
        if acc.shape[0] > m_valid:                           # mask zero-pad rows
            row_ok = jax.lax.broadcasted_iota(
                jnp.int32, (acc.shape[0], 1), 0) < m_valid
            centered = jnp.where(row_ok, centered, 0.0)
        var = jnp.sum(centered * centered, axis=0, keepdims=True) * inv_m
        scale = g_ref[...] * jax.lax.rsqrt(var + BN_EPS)
        shift = bt_ref[...] - mean * scale
        z = acc * scale + shift
        o_ref[...] = jnp.where(z > 0, z, LEAK * z).astype(o_ref.dtype)


def _matmul_head_kernel(a_ref, b_ref, m_ref, o_ref, acc_ref):
    """K-tiled matmul for both heads; sigmoid applied only where mask > 0.5."""
    k = pl.program_id(0)

    @pl.when(k == 0)
    def _():
        acc_ref[...] = jnp.zeros_like(acc_ref)

    acc_ref[...] += jnp.dot(a_ref[...], b_ref[...],
                            preferred_element_type=jnp.float32)

    @pl.when(k == pl.num_programs(0) - 1)
    def _():
        y = acc_ref[...]
        sig = 0.5 * (jnp.tanh(0.5 * y) + 1.0)     # sigmoid via tanh -> EUP slot
        o_ref[...] = jnp.where(m_ref[...] > 0.5, sig, y).astype(o_ref.dtype)


# ---------------------------------------------------------------------------
# pallas_call wrappers
# ---------------------------------------------------------------------------
def matmul_leaky(a, b, tm):
    Mp, Kp = a.shape
    _, Cp = b.shape
    return pl.pallas_call(
        _matmul_leaky_kernel,
        out_shape=jax.ShapeDtypeStruct((Mp, Cp), jnp.bfloat16),
        grid_spec=pltpu.PrefetchScalarGridSpec(
            num_scalar_prefetch=0,
            grid=(Mp // tm,),
            in_specs=[pl.BlockSpec((tm, Kp), lambda i: (i, 0)),
                      pl.BlockSpec((Kp, Cp), lambda i: (0, 0))],
            out_specs=pl.BlockSpec((tm, Cp), lambda i: (i, 0))),
        compiler_params=pltpu.CompilerParams(dimension_semantics=("parallel",)),
    )(a, b)


def matmul_bn_leaky(a, b, gamma, beta, m_valid, tk, tc):
    Mp, Kp = a.shape
    _, Cp = b.shape
    nc, nk = Cp // tc, Kp // tk
    kernel = functools.partial(_matmul_bn_leaky_kernel, m_valid=m_valid)
    return pl.pallas_call(
        kernel,
        out_shape=jax.ShapeDtypeStruct((Mp, Cp), jnp.bfloat16),
        grid_spec=pltpu.PrefetchScalarGridSpec(
            num_scalar_prefetch=0,
            grid=(nc, nk),
            in_specs=[pl.BlockSpec((Mp, tk), lambda c, k: (0, k)),
                      pl.BlockSpec((tk, tc), lambda c, k: (k, c)),
                      pl.BlockSpec((1, tc), lambda c, k: (0, c)),
                      pl.BlockSpec((1, tc), lambda c, k: (0, c))],
            out_specs=pl.BlockSpec((Mp, tc), lambda c, k: (0, c)),
            scratch_shapes=[pltpu.VMEM((Mp, tc), jnp.float32)]),
        compiler_params=pltpu.CompilerParams(
            dimension_semantics=("parallel", "arbitrary")),
    )(a, b, gamma.reshape(1, Cp), beta.reshape(1, Cp))


def matmul_head(a, b, mask, tk):
    Mp, Kp = a.shape
    _, Cp = b.shape
    return pl.pallas_call(
        _matmul_head_kernel,
        out_shape=jax.ShapeDtypeStruct((Mp, Cp), jnp.float32),
        grid_spec=pltpu.PrefetchScalarGridSpec(
            num_scalar_prefetch=0,
            grid=(Kp // tk,),
            in_specs=[pl.BlockSpec((Mp, tk), lambda k: (0, k)),
                      pl.BlockSpec((tk, Cp), lambda k: (k, 0)),
                      pl.BlockSpec((1, Cp), lambda k: (0, 0))],
            out_specs=pl.BlockSpec((Mp, Cp), lambda k: (0, 0)),
            scratch_shapes=[pltpu.VMEM((Mp, Cp), jnp.float32)]),
        compiler_params=pltpu.CompilerParams(dimension_semantics=("arbitrary",)),
    )(a, b, mask)


# ---------------------------------------------------------------------------
# Conv blocks (im2col / padding are plain-JAX glue; matmuls are Pallas)
# ---------------------------------------------------------------------------
def _im2col(x_nhwc, k, stride, pad):
    N, H, W, Ci = x_nhwc.shape
    Ho = (H + 2 * pad - k) // stride + 1
    Wo = (W + 2 * pad - k) // stride + 1
    if Ho == 1 and Wo == 1 and pad == 0 and stride == 1 and k == H and k == W:
        # full-window conv (the heads): im2col is just a reshape, no gather.
        return x_nhwc.reshape(N, k * k * Ci), Ho, Wo
    xp = jnp.pad(x_nhwc, ((0, 0), (pad, pad), (pad, pad), (0, 0)))
    cols = [xp[:, kh:kh + (Ho - 1) * stride + 1:stride,
                  kw:kw + (Wo - 1) * stride + 1:stride, :]
            for kh in range(k) for kw in range(k)]
    A = jnp.concatenate(cols, axis=-1).reshape(N * Ho * Wo, k * k * Ci)
    return A, Ho, Wo
    # TODO(synk): im2col could be folded into the matmul via a (kh,kw) grid
    # axis over the padded NHWC input to avoid the 16x HBM blow-up; kept as
    # XLA glue here for robustness at these small shapes.


def _pad_operands(A, Wm, row_mult):
    """Pad to TPU tiles and cast to bf16 (pad rows/cols are exact zeros)."""
    M, K = A.shape
    Co = Wm.shape[1]
    Mp = _round_up(M, row_mult)
    Kp = _round_up(K, LANE)
    Cp = _round_up(Co, LANE)
    Ap = jnp.pad(A, ((0, Mp - M), (0, Kp - K))).astype(jnp.bfloat16)
    Wp = jnp.pad(Wm, ((0, Kp - K), (0, Cp - Co))).astype(jnp.bfloat16)
    return Ap, Wp


def conv_leaky(x_nhwc, w, stride, pad):
    """Conv2d(bias=False) + LeakyReLU(0.2), activation fused in the matmul."""
    N = x_nhwc.shape[0]
    Co, Ci, k, _ = w.shape
    A, Ho, Wo = _im2col(x_nhwc, k, stride, pad)
    Wm = jnp.transpose(w, (2, 3, 1, 0)).reshape(k * k * Ci, Co)   # (kh,kw,ci,co)
    M = A.shape[0]
    tm = min(1024, _round_up(M, 8))
    Ap, Wp = _pad_operands(A, Wm, row_mult=tm)
    out = matmul_leaky(Ap, Wp, tm)
    return out[:M, :Co].reshape(N, Ho, Wo, Co)


def conv_bn_leaky(x_nhwc, w, gamma, beta, stride, pad):
    """Conv2d(bias=False) + BatchNorm2d(training batch stats) + LeakyReLU(0.2),
    all fused into a single K-tiled Pallas matmul."""
    N = x_nhwc.shape[0]
    Co, Ci, k, _ = w.shape
    A, Ho, Wo = _im2col(x_nhwc, k, stride, pad)
    Wm = jnp.transpose(w, (2, 3, 1, 0)).reshape(k * k * Ci, Co)
    M = A.shape[0]
    Mp = _round_up(M, 8)
    # The fused BN epilogue needs the whole batch resident in one row block.
    # TODO(synk): for much larger batches switch to a two-pass (stats matmul +
    # normalize) pipeline; not needed at these shapes.
    assert Mp <= 4096, "fused Conv+BN kernel assumes whole batch fits one row block"
    Ap, Wp = _pad_operands(A, Wm, row_mult=8)
    Kp, Cp = Wp.shape
    tk, tc = _k_tile(Kp), _c_tile(Cp)
    gp = jnp.pad(gamma.astype(jnp.float32), (0, Cp - Co))
    bp = jnp.pad(beta.astype(jnp.float32), (0, Cp - Co))
    out = matmul_bn_leaky(Ap, Wp, gp, bp, M, tk, tc)
    return out[:M, :Co].reshape(N, Ho, Wo, Co)


def heads(x_nhwc, w_out, w_cls):
    """paths[0]: Conv(512->1,4,1,0)+Sigmoid ; paths[1]: Conv(512->G,4,1,0).

    Both heads consume the same 4x4x512 features, so they are concatenated
    along Co and computed with a single lane-dense K-tiled matmul; the sigmoid
    is fused into the epilogue via a per-column mask."""
    N = x_nhwc.shape[0]
    Ci, k = w_out.shape[1], w_out.shape[2]
    G = w_cls.shape[0]
    A, Ho, Wo = _im2col(x_nhwc, k, stride=1, pad=0)              # pure reshape
    w_all = jnp.concatenate([w_out, w_cls], axis=0)              # (1+G, Ci, k, k)
    Wm = jnp.transpose(w_all, (2, 3, 1, 0)).reshape(k * k * Ci, 1 + G)
    M, Co = A.shape[0], 1 + G
    Ap, Wp = _pad_operands(A, Wm, row_mult=8)
    Kp, Cp = Wp.shape
    tk = _k_tile(Kp)
    mask = jnp.zeros((1, Cp), jnp.float32).at[0, 0].set(1.0)     # sigmoid col 0
    out = matmul_head(Ap, Wp, mask, tk)[:M, :Co]
    output = out[:, 0:1].reshape(N, 1, Ho, Wo)                   # NCHW
    classifier = out[:, 1:1 + G].reshape(N, G, Ho, Wo)
    return output, classifier


# ---------------------------------------------------------------------------
# Discriminator_cifar10
# ---------------------------------------------------------------------------
def init_params(key, channels_num, G_paths):
    def conv_w(k, shape):
        return 0.02 * jax.random.normal(k, shape, jnp.float32)
    ks = jax.random.split(key, 6)
    return dict(
        conv1_w=conv_w(ks[0], (64, channels_num, 4, 4)),
        conv2_w=conv_w(ks[1], (128, 64, 4, 4)),
        bn2_g=jnp.ones((128,), jnp.float32), bn2_b=jnp.zeros((128,), jnp.float32),
        conv3_w=conv_w(ks[2], (256, 128, 4, 4)),
        bn3_g=jnp.ones((256,), jnp.float32), bn3_b=jnp.zeros((256,), jnp.float32),
        conv4_w=conv_w(ks[3], (512, 256, 4, 4)),
        bn4_g=jnp.ones((512,), jnp.float32), bn4_b=jnp.zeros((512,), jnp.float32),
        out_w=conv_w(ks[4], (1, 512, 4, 4)),           # paths[0] conv
        cls_w=conv_w(ks[5], (G_paths, 512, 4, 4)),     # paths[1] conv
    )


def discriminator_cifar10_forward(x_nchw, params):
    """x_nchw: (N, channels_num, 64, 64) -> (output (N,1,1,1), classifier (N,G,1,1))."""
    x = jnp.transpose(x_nchw, (0, 2, 3, 1)).astype(jnp.float32)   # -> NHWC
    h = conv_leaky(x, params["conv1_w"], stride=2, pad=1)
    h = conv_bn_leaky(h, params["conv2_w"], params["bn2_g"], params["bn2_b"], 2, 1)
    h = conv_bn_leaky(h, params["conv3_w"], params["bn3_g"], params["bn3_b"], 2, 1)
    h = conv_bn_leaky(h, params["conv4_w"], params["bn4_g"], params["bn4_b"], 2, 1)
    return heads(h, params["out_w"], params["cls_w"])


if __name__ == "__main__":
    # The architecture requires 64x64 input (4 stride-2 convs -> 4x4, then the
    # 4x4/stride-1/pad-0 head convs -> 1x1), so spatial=64, small batch/paths.
    channels_num, G_paths, batch = 3, 2, 2

    key = jax.random.PRNGKey(0)
    kparam, kx = jax.random.split(key)
    params = init_params(kparam, channels_num, G_paths)
    x = jax.random.normal(kx, (batch, channels_num, 64, 64), jnp.float32)

    output, classifier = discriminator_cifar10_forward(x, params)
    output, classifier = jax.block_until_ready((output, classifier))

    assert output.shape == (batch, 1, 1, 1), output.shape
    assert classifier.shape == (batch, G_paths, 1, 1), classifier.shape
    assert bool(jnp.all(jnp.isfinite(output)))
    assert bool(jnp.all(jnp.isfinite(classifier)))
    assert bool(jnp.all((output >= 0.0) & (output <= 1.0)))   # sigmoid range
    print("KERNEL_OK")
</pallas_src>

<mosaic_0001>
module attributes {stable_mosaic.version = 11 : i64} {
  func.func @_matmul_leaky_kernel(%arg0: i32, %arg1: memref<1024x128xbf16, #tpu.memory_space<vmem>>, %arg2: memref<128x128xbf16, #tpu.memory_space<vmem>>, %arg3: memref<1024x128xbf16, #tpu.memory_space<vmem>>) attributes {dimension_semantics = [#tpu.dimension_semantics<parallel>], iteration_bounds = array<i64: 2>, scalar_prefetch = 0 : i64, scratch_operands = 0 : i64, tpu.core_type = #tpu.core_type<tc>, window_params = [{transform_indices = @transform_0, window_bounds = array<i64: 1024, 128>}, {pipeline_mode = #tpu.pipeline_mode<synchronous>, transform_indices = @transform_1, window_bounds = array<i64: 128, 128>}, {transform_indices = @transform_2, window_bounds = array<i64: 1024, 128>}]} {
    %c0 = arith.constant 0 : index
    %c0_0 = arith.constant 0 : index
    %0 = vector.load %arg1[%c0, %c0_0] : memref<1024x128xbf16, #tpu.memory_space<vmem>>, vector<1024x128xbf16>
    %c0_1 = arith.constant 0 : index
    %c0_2 = arith.constant 0 : index
    %1 = vector.load %arg2[%c0_1, %c0_2] : memref<128x128xbf16, #tpu.memory_space<vmem>>, vector<128x128xbf16>
    %cst = arith.constant dense<0.000000e+00> : vector<1024x128xf32>
    %2 = tpu.matmul %0, %1, %cst {dimension_numbers = #tpu.dot_dimension_numbers<[1], [0], [0], [1], [0, 0, 1, 1], [], []>} : vector<1024x128xbf16>, vector<128x128xbf16>, vector<1024x128xf32> -> vector<1024x128xf32>
    %cst_3 = arith.constant 0.000000e+00 : f32
    %3 = vector.broadcast %cst_3 : f32 to vector<1024x128xf32>
    %4 = arith.cmpf ogt, %2, %3 : vector<1024x128xf32>
    %cst_4 = arith.constant 2.000000e-01 : f32
    %5 = vector.broadcast %cst_4 : f32 to vector<1024x128xf32>
    %6 = arith.mulf %5, %2 : vector<1024x128xf32>
    %7 = arith.select %4, %2, %6 : vector<1024x128xi1>, vector<1024x128xf32>
    %8 = arith.truncf %7 : vector<1024x128xf32> to vector<1024x128xbf16>
    %c0_5 = arith.constant 0 : index
    %c0_6 = arith.constant 0 : index
    %9 = vector.load %arg3[%c0_5, %c0_6] : memref<1024x128xbf16, #tpu.memory_space<vmem>>, vector<1024x128xbf16>
    tpu.vector_store %arg3[%c0_5, %c0_6], %8 {strides = array<i32>} : memref<1024x128xbf16, #tpu.memory_space<vmem>>, vector<1024x128xbf16>,
    return
  }
  func.func @transform_0(%arg0: i32) -> (i32, i32) {
    %c0_i32 = arith.constant 0 : i32
    %c0_i32_0 = arith.constant 0 : i32
    return %arg0, %c0_i32 : i32, i32
  }
  func.func @transform_1(%arg0: i32) -> (i32, i32) {
    %c0_i32 = arith.constant 0 : i32
    %c0_i32_0 = arith.constant 0 : i32
    %c0_i32_1 = arith.constant 0 : i32
    return %c0_i32, %c0_i32_0 : i32, i32
  }
  func.func @transform_2(%arg0: i32) -> (i32, i32) {
    %c0_i32 = arith.constant 0 : i32
    %c0_i32_0 = arith.constant 0 : i32
    return %arg0, %c0_i32 : i32, i32
  }
}

</mosaic_0001>

<llo_original>
// kernel: tpu_custom_call.1
$region0: #{tpu_custom_call.1}
  #allocation0 [shape = 'u32[]', space=smem, size = 0x4, offset = 0x4, fixed_abs, tag = 'smem constant byte address 0x4 - core index']
  #allocation1 [shape = 'u32[144,128]{1,0:T(1,128)}', space=vmem, size = 0x12000, scoped, tag = 'internal scratch']
  %s0 = inlined_call_operand.hbm [shape: bf16[2048,128], index: 0, kind: input, shape index: {}]
  %s1 = inlined_call_operand.hbm [shape: bf16[128,128], index: 1, kind: input, shape index: {}]
  %s2 = inlined_call_operand.hbm [shape: bf16[2048,128], index: 2, kind: output, shape index: {}]
  %s3 = sld [smem:[#allocation0]]
  $region49: #{tpu_custom_call.1} parent=0
    _
  %s5 = ssub.s32 1, %s3
  %s6 = scalar_select 0, %s5, %s3
  $region1: #{tpu_custom_call.1} parent=0
    #allocation2 [shape = 'u8[524288]{0}', space=vmem, size = 0x80000, scoped, tag = 'input window, operand 0']
    #allocation3 [shape = 's32[2]{0}', space=sflag, size = 0x8, scoped, tag = 'scoped memory for tpu_custom_call.1']
    #allocation4 [shape = 's32[2]{0}', space=sflag, size = 0x8, scoped, tag = 'scoped memory for tpu_custom_call.1']
    #allocation5 [shape = 'u8[32768]{0}', space=vmem, size = 0x8000, scoped, tag = 'input window, operand 1, single buffered']
    #allocation6 [shape = 's32[1]{0}', space=sflag, size = 0x4, scoped, tag = 'scoped memory for tpu_custom_call.1']
    #allocation7 [shape = 'u8[524288]{0}', space=vmem, size = 0x80000, scoped, tag = 'output window, operand 0']
    %7 = vsyncpa [#allocation3], 0
    %s8 = scalar_lea.sflag [#allocation3], 1
    %9 = vsyncpa %s8, 0
    %10 = vsyncpa [#allocation6], 0
    %11 = vsyncpa [#allocation4], 0
    %s12 = scalar_lea.sflag [#allocation4], 1
    %13 = vsyncpa %s12, 0
    loop: start=0, step=1, limit=4
    $region2: #{tpu_custom_call.1} parent=1 // loop_pre_header
      _
    $region3: #{tpu_custom_call.1} parent=1 // loop_header
      %s15 = sphi 0, %s19
      %p16 = scmp.ge.s32.totalorder %s15, 4
      %s25 = sphi 0, %s27
      %s28 = sphi 0, %s25
      %s29 = sphi 0, %s28
      %s45 = sphi 0, %s29
      %s49 = sphi 0, %s49
      %s51 = sphi 0, %s49
      %s52 = sphi 0, %s51
      %s66 = sphi 0, %s52
      %s72 = sphi 0, %s74
      %s75 = sphi 0, %s72
      %s76 = sphi 0, %s75
      %s92 = sphi 0, %s76
    $region4: #{tpu_custom_call.1} parent=1 // loop_header_branch
      %18 = sbr.rel (%p16) target = $region8
    $region5: #{tpu_custom_call.1} parent=1 // loop_body
      %s20 = ssub.s32 %s15, 1
      %s21 = ssub.s32 %s15, 2
      %s22 = sadd.s32 %s15, 1
      %s23 = ssub.s32 %s15, %s22
      %p24 = scmp.eq.s32.totalorder %s23, 0
      %s26 = sadd.s32 %s25, 1
      %s27 = scalar_select %p24, %s25, %s26
      %p30 = pneg %p24
      %p31 = scmp.eq.s32.totalorder %s15, 1
      %p32 = por %p30, %p31
      %p33 = scmp.ne.s32.totalorder %s25, %s28
      %p34 = scmp.eq.s32.totalorder %s15, 0
      %p35 = por %p33, %p34
      %p36 = scmp.ne.s32.totalorder %s25, %s28
      %p37 = scmp.eq.s32.totalorder %s20, 1
      %p38 = por %p36, %p37
      %p39 = scmp.ne.s32.totalorder %s28, %s29
      %p40 = scmp.eq.s32.totalorder %s20, 0
      %p41 = por %p39, %p40
      %p42 = scmp.ne.s32.totalorder %s28, %s29
      %p43 = scmp.eq.s32.totalorder %s21, 1
      %p44 = por %p42, %p43
      %p46 = scmp.ne.s32.totalorder %s29, %s45
      %p47 = scmp.eq.s32.totalorder %s21, 0
      %p48 = por %p46, %p47
      %s50 = sadd.s32 %s49, 1
      %p53 = scmp.eq.s32.totalorder %s15, 1
      %p54 = scmp.ne.s32.totalorder %s49, %s51
      %p55 = scmp.eq.s32.totalorder %s15, 0
      %p56 = por %p54, %p55
      %p57 = scmp.ne.s32.totalorder %s49, %s51
      %p58 = scmp.eq.s32.totalorder %s20, 1
      %p59 = por %p57, %p58
      %p60 = scmp.ne.s32.totalorder %s51, %s52
      %p61 = scmp.eq.s32.totalorder %s20, 0
      %p62 = por %p60, %p61
      %p63 = scmp.ne.s32.totalorder %s51, %s52
      %p64 = scmp.eq.s32.totalorder %s21, 1
      %p65 = por %p63, %p64
      %p67 = scmp.ne.s32.totalorder %s52, %s66
      %p68 = scmp.eq.s32.totalorder %s21, 0
      %p69 = por %p67, %p68
      %s70 = ssub.s32 %s15, %s22
      %p71 = scmp.eq.s32.totalorder %s70, 0
      %s73 = sadd.s32 %s72, 1
      %s74 = scalar_select %p71, %s72, %s73
      %p77 = pneg %p71
      %p78 = scmp.eq.s32.totalorder %s15, 1
      %p79 = por %p77, %p78
      %p80 = scmp.ne.s32.totalorder %s72, %s75
      %p81 = scmp.eq.s32.totalorder %s15, 0
      %p82 = por %p80, %p81
      %p83 = scmp.ne.s32.totalorder %s72, %s75
      %p84 = scmp.eq.s32.totalorder %s20, 1
      %p85 = por %p83, %p84
      %p86 = scmp.ne.s32.totalorder %s75, %s76
      %p87 = scmp.eq.s32.totalorder %s20, 0
      %p88 = por %p86, %p87
      %p89 = scmp.ne.s32.totalorder %s75, %s76
      %p90 = scmp.eq.s32.totalorder %s21, 1
      %p91 = por %p89, %p90
      %p93 = scmp.ne.s32.totalorder %s76, %s92
      %p94 = scmp.eq.s32.totalorder %s21, 0
      %p95 = por %p93, %p94
      %p96 = scmp.le.s32.totalorder 1, %s15
      %p97 = scmp.lt.s32.totalorder %s15, 3
      %p98 = pnand %p96, %p97
      %p99 = pneg %p98
      // Predicated region
      $region9: #{tpu_custom_call.1} parent=5 // pred_check
        _
      $region10: #{tpu_custom_call.1} parent=5 // pred_check_branch
        %101 = sbr.rel (%p98) target = $region12
      $region11: #{tpu_custom_call.1} parent=5 // pred_region
        %s102 = ssub.s32 %s15, 1
        // Predicated region
        $region13: #{tpu_custom_call.1} parent=11 // pred_check
          %p103 = pneg %p62
        $region14: #{tpu_custom_call.1} parent=11 // pred_check_branch
          %105 = sbr.rel (%p103) target = $region16
        $region15: #{tpu_custom_call.1} parent=11 // pred_region
          %s107 = ssub.s32 1024, 1024
          %108 = vsyncadd [#allocation6], %s107
          %s109 = sshll.u32 [#allocation5], 4
          %s110 = int_to_ptr.vmem [resolvable:$true] %s109
          %115 = dma.hbm_to_vmem [thread:$0]  %s1, 1024, %s110, [#allocation6], 64, 64, 4
        $region16: #{tpu_custom_call.1} parent=11 // pred_fallthru
          _
      $region12: #{tpu_custom_call.1} parent=5 // pred_fallthru
        _
      %p116 = scmp.lt.s32.totalorder %s15, 2
      // Predicated region
      $region17: #{tpu_custom_call.1} parent=5 // pred_check
        %p117 = pneg %p116
      $region18: #{tpu_custom_call.1} parent=5 // pred_check_branch
        %119 = sbr.rel (%p117) target = $region20
      $region19: #{tpu_custom_call.1} parent=5 // pred_region
        // Predicated region
        $region21: #{tpu_custom_call.1} parent=19 // pred_check
          %p120 = pneg %p35
        $region22: #{tpu_custom_call.1} parent=19 // pred_check_branch
          %122 = sbr.rel (%p120) target = $region24
        $region23: #{tpu_custom_call.1} parent=19 // pred_region
          %s123 = sand.u32 %s25, 1
          %s124 = scalar_lea.sflag [#allocation3], %s123
          %s125 = sand.u32 %s25, 1
          %s126 = smul.addr %s125, 512
          %s127 = scalar_lea.vmem [#allocation2], %s126
          %s128 = smul.u32 128, %s15
          %s130 = ssub.s32 8192, 8192
          %131 = vsyncadd %s124, %s130
          %s132 = smul.addr %s128, 64
          %s133 = scalar_lea.hbm %s0, %s132
          %s134 = sshll.u32 %s127, 4
          %s135 = int_to_ptr.vmem [resolvable:$true] %s134
          %140 = dma.hbm_to_vmem [thread:$0]  %s133, 8192, %s135, %s124, 64, 64, 4
        $region24: #{tpu_custom_call.1} parent=19 // pred_fallthru
          _
      $region20: #{tpu_custom_call.1} parent=5 // pred_fallthru
        _
      %p141 = scmp.le.s32.totalorder 1, %s15
      %p142 = scmp.lt.s32.totalorder %s15, 3
      %p143 = pnand %p141, %p142
      %p144 = pneg %p143
      // Predicated region
      $region25: #{tpu_custom_call.1} parent=5 // pred_check
        _
      $region26: #{tpu_custom_call.1} parent=5 // pred_check_branch
        %146 = sbr.rel (%p143) target = $region28
      $region27: #{tpu_custom_call.1} parent=5 // pred_region
        %s147 = ssub.s32 %s15, 1
        %s148 = sand.u32 %s28, 1
        %s149 = scalar_lea.sflag [#allocation3], %s148
        %s150 = sand.u32 %s28, 1
        %s151 = smul.addr %s150, 512
        %s152 = scalar_lea.vmem [#allocation2], %s151
        // Predicated region
        $region29: #{tpu_custom_call.1} parent=27 // pred_check
          %p153 = pneg %p41
        $region30: #{tpu_custom_call.1} parent=27 // pred_check_branch
          %155 = sbr.rel (%p153) target = $region32
        $region31: #{tpu_custom_call.1} parent=27 // pred_region
          %156 = dma.done %s149, 8192
        $region32: #{tpu_custom_call.1} parent=27 // pred_fallthru
          _
        // Predicated region
        $region33: #{tpu_custom_call.1} parent=27 // pred_check
          %p157 = pneg %p62
        $region34: #{tpu_custom_call.1} parent=27 // pred_check_branch
          %159 = sbr.rel (%p157) target = $region36
        $region35: #{tpu_custom_call.1} parent=27 // pred_region
          %160 = dma.done [#allocation6], 1024
        $region36: #{tpu_custom_call.1} parent=27 // pred_fallthru
          _
        %s161 = sand.u32 %s28, 1
        %s162 = scalar_lea.sflag [#allocation3], %s161
        %s163 = sand.u32 %s28, 1
        %s164 = smul.addr %s163, 512
        %s165 = scalar_lea.vmem [#allocation2], %s164
        %p166 = pneg %p41
        %p167 = pneg %p38
        %p168 = pneg %p62
        %p169 = pneg %p59
        %p170 = pneg %p88
        %p171 = pneg %p85
        %s172 = sand.u32 %s75, 1
        %s173 = scalar_lea.sflag [#allocation4], %s172
        %s174 = sand.u32 %s75, 1
        %s175 = smul.addr %s174, 512
        %s176 = scalar_lea.vmem [#allocation7], %s175
        %s177 = smul.u32 128, %s20
        %s178 = smul.u32 128, %s20
        %v180 = vld [vmem:[%s152] sm:$0xf]
        %v181 = vld [vmem:[%s152 + $0x4] sm:$0xf]
        %v182 = vld [vmem:[%s152 + $0x8] sm:$0xf]
        %v183 = vld [vmem:[%s152 + $0xc] sm:$0xf]
        %v184 = vld [vmem:[%s152 + $0x10] sm:$0xf]
        %v185 = vld [vmem:[%s152 + $0x14] sm:$0xf]
        %v186 = vld [vmem:[%s152 + $0x18] sm:$0xf]
        %v187 = vld [vmem:[%s152 + $0x1c] sm:$0xf]
        %v188 = vld [vmem:[%s152 + $0x20] sm:$0xf]
        %v189 = vld [vmem:[%s152 + $0x24] sm:$0xf]
        %v190 = vld [vmem:[%s152 + $0x28] sm:$0xf]
        %v191 = vld [vmem:[%s152 + $0x2c] sm:$0xf]
        %v192 = vld [vmem:[%s152 + $0x30] sm:$0xf]
        %v193 = vld [vmem:[%s152 + $0x34] sm:$0xf]
        %v194 = vld [vmem:[%s152 + $0x38] sm:$0xf]
        %v195 = vld [vmem:[%s152 + $0x3c] sm:$0xf]
        %v196 = vld [vmem:[%s152 + $0x40] sm:$0xf]
        %v197 = vld [vmem:[%s152 + $0x44] sm:$0xf]
        %v198 = vld [vmem:[%s152 + $0x48] sm:$0xf]
        %v199 = vld [vmem:[%s152 + $0x4c] sm:$0xf]
        %v200 = vld [vmem:[%s152 + $0x50] sm:$0xf]
        %v201 = vld [vmem:[%s152 + $0x54] sm:$0xf]
        %v202 = vld [vmem:[%s152 + $0x58] sm:$0xf]
        %v203 = vld [vmem:[%s152 + $0x5c] sm:$0xf]
        %v204 = vld [vmem:[%s152 + $0x60] sm:$0xf]
        %v205 = vld [vmem:[%s152 + $0x64] sm:$0xf]
        %v206 = vld [vmem:[%s152 + $0x68] sm:$0xf]
        %v207 = vld [vmem:[%s152 + $0x6c] sm:$0xf]
        %v208 = vld [vmem:[%s152 + $0x70] sm:$0xf]
        %v209 = vld [vmem:[%s152 + $0x74] sm:$0xf]
        %v210 = vld [vmem:[%s152 + $0x78] sm:$0xf]
        %v211 = vld [vmem:[%s152 + $0x7c] sm:$0xf]
        %v212 = vld [vmem:[%s152 + $0x80] sm:$0xf]
        %v213 = vld [vmem:[%s152 + $0x84] sm:$0xf]
        %v214 = vld [vmem:[%s152 + $0x88] sm:$0xf]
        %v215 = vld [vmem:[%s152 + $0x8c] sm:$0xf]
        %v216 = vld [vmem:[%s152 + $0x90] sm:$0xf]
        %v217 = vld [vmem:[%s152 + $0x94] sm:$0xf]
        %v218 = vld [vmem:[%s152 + $0x98] sm:$0xf]
        %v219 = vld [vmem:[%s152 + $0x9c] sm:$0xf]
        %v220 = vld [vmem:[%s152 + $0xa0] sm:$0xf]
        %v221 = vld [vmem:[%s152 + $0xa4] sm:$0xf]
        %v222 = vld [vmem:[%s152 + $0xa8] sm:$0xf]
        %v223 = vld [vmem:[%s152 + $0xac] sm:$0xf]
        %v224 = vld [vmem:[%s152 + $0xb0] sm:$0xf]
        %v225 = vld [vmem:[%s152 + $0xb4] sm:$0xf]
        %v226 = vld [vmem:[%s152 + $0xb8] sm:$0xf]
        %v227 = vld [vmem:[%s152 + $0xbc] sm:$0xf]
        %v228 = vld [vmem:[%s152 + $0xc0] sm:$0xf]
        %v229 = vld [vmem:[%s152 + $0xc4] sm:$0xf]
        %v230 = vld [vmem:[%s152 + $0xc8] sm:$0xf]
        %v231 = vld [vmem:[%s152 + $0xcc] sm:$0xf]
        %v232 = vld [vmem:[%s152 + $0xd0] sm:$0xf]
        %v233 = vld [vmem:[%s152 + $0xd4] sm:$0xf]
        %v234 = vld [vmem:[%s152 + $0xd8] sm:$0xf]
        %v235 = vld [vmem:[%s152 + $0xdc] sm:$0xf]
        %v236 = vld [vmem:[%s152 + $0xe0] sm:$0xf]
        %v237 = vld [vmem:[%s152 + $0xe4] sm:$0xf]
        %v238 = vld [vmem:[%s152 + $0xe8] sm:$0xf]
        %v239 = vld [vmem:[%s152 + $0xec] sm:$0xf]
        %v240 = vld [vmem:[%s152 + $0xf0] sm:$0xf]
        %v241 = vld [vmem:[%s152 + $0xf4] sm:$0xf]
        %v242 = vld [vmem:[%s152 + $0xf8] sm:$0xf]
        %v243 = vld [vmem:[%s152 + $0xfc] sm:$0xf]
        %v244 = vld [vmem:[%s152 + $0x100] sm:$0xf]
        %v245 = vld [vmem:[%s152 + $0x104] sm:$0xf]
        %v246 = vld [vmem:[%s152 + $0x108] sm:$0xf]
        %v247 = vld [vmem:[%s152 + $0x10c] sm:$0xf]
        %v248 = vld [vmem:[%s152 + $0x110] sm:$0xf]
        %v249 = vld [vmem:[%s152 + $0x114] sm:$0xf]
        %v250 = vld [vmem:[%s152 + $0x118] sm:$0xf]
        %v251 = vld [vmem:[%s152 + $0x11c] sm:$0xf]
        %v252 = vld [vmem:[%s152 + $0x120] sm:$0xf]
        %v253 = vld [vmem:[%s152 + $0x124] sm:$0xf]
        %v254 = vld [vmem:[%s152 + $0x128] sm:$0xf]
        %v255 = vld [vmem:[%s152 + $0x12c] sm:$0xf]
        %v256 = vld [vmem:[%s152 + $0x130] sm:$0xf]
        %v257 = vld [vmem:[%s152 + $0x134] sm:$0xf]
        %v258 = vld [vmem:[%s152 + $0x138] sm:$0xf]
        %v259 = vld [vmem:[%s152 + $0x13c] sm:$0xf]
        %v260 = vld [vmem:[%s152 + $0x140] sm:$0xf]
        %v261 = vld [vmem:[%s152 + $0x144] sm:$0xf]
        %v262 = vld [vmem:[%s152 + $0x148] sm:$0xf]
        %v263 = vld [vmem:[%s152 + $0x14c] sm:$0xf]
        %v264 = vld [vmem:[%s152 + $0x150] sm:$0xf]
        %v265 = vld [vmem:[%s152 + $0x154] sm:$0xf]
        %v266 = vld [vmem:[%s152 + $0x158] sm:$0xf]
        %v267 = vld [vmem:[%s152 + $0x15c] sm:$0xf]
        %v268 = vld [vmem:[%s152 + $0x160] sm:$0xf]
        %v269 = vld [vmem:[%s152 + $0x164] sm:$0xf]
        %v270 = vld [vmem:[%s152 + $0x168] sm:$0xf]
        %v271 = vld [vmem:[%s152 + $0x16c] sm:$0xf]
        %v272 = vld [vmem:[%s152 + $0x170] sm:$0xf]
        %v273 = vld [vmem:[%s152 + $0x174] sm:$0xf]
        %v274 = vld [vmem:[%s152 + $0x178] sm:$0xf]
        %v275 = vld [vmem:[%s152 + $0x17c] sm:$0xf]
        %v276 = vld [vmem:[%s152 + $0x180] sm:$0xf]
        %v277 = vld [vmem:[%s152 + $0x184] sm:$0xf]
        %v278 = vld [vmem:[%s152 + $0x188] sm:$0xf]
        %v279 = vld [vmem:[%s152 + $0x18c] sm:$0xf]
        %v280 = vld [vmem:[%s152 + $0x190] sm:$0xf]
        %v281 = vld [vmem:[%s152 + $0x194] sm:$0xf]
        %v282 = vld [vmem:[%s152 + $0x198] sm:$0xf]
        %v283 = vld [vmem:[%s152 + $0x19c] sm:$0xf]
        %v284 = vld [vmem:[%s152 + $0x1a0] sm:$0xf]
        %v285 = vld [vmem:[%s152 + $0x1a4] sm:$0xf]
        %v286 = vld [vmem:[%s152 + $0x1a8] sm:$0xf]
        %v287 = vld [vmem:[%s152 + $0x1ac] sm:$0xf]
        %v288 = vld [vmem:[%s152 + $0x1b0] sm:$0xf]
        %v289 = vld [vmem:[%s152 + $0x1b4] sm:$0xf]
        %v290 = vld [vmem:[%s152 + $0x1b8] sm:$0xf]
        %v291 = vld [vmem:[%s152 + $0x1bc] sm:$0xf]
        %v292 = vld [vmem:[%s152 + $0x1c0] sm:$0xf]
        %v293 = vld [vmem:[%s152 + $0x1c4] sm:$0xf]
        %v294 = vld [vmem:[%s152 + $0x1c8] sm:$0xf]
        %v295 = vld [vmem:[%s152 + $0x1cc] sm:$0xf]
        %v296 = vld [vmem:[%s152 + $0x1d0] sm:$0xf]
        %v297 = vld [vmem:[%s152 + $0x1d4] sm:$0xf]
        %v298 = vld [vmem:[%s152 + $0x1d8] sm:$0xf]
        %v299 = vld [vmem:[%s152 + $0x1dc] sm:$0xf]
        %v300 = vld [vmem:[%s152 + $0x1e0] sm:$0xf]
        %v301 = vld [vmem:[%s152 + $0x1e4] sm:$0xf]
        %v302 = vld [vmem:[%s152 + $0x1e8] sm:$0xf]
        %v303 = vld [vmem:[%s152 + $0x1ec] sm:$0xf]
        %v304 = vld [vmem:[%s152 + $0x1f0] sm:$0xf]
        %v305 = vld [vmem:[%s152 + $0x1f4] sm:$0xf]
        %v306 = vld [vmem:[%s152 + $0x1f8] sm:$0xf]
        %v307 = vld [vmem:[%s152 + $0x1fc] sm:$0xf]
        %v308 = vld [vmem:[#allocation5] sm:$0xf]
        %v309 = vld [vmem:[#allocation5 + $0x4] sm:$0xf]
        %v310 = vld [vmem:[#allocation5 + $0x8] sm:$0xf]
        %v311 = vld [vmem:[#allocation5 + $0xc] sm:$0xf]
        %v312 = vld [vmem:[#allocation5 + $0x10] sm:$0xf]
        %v313 = vld [vmem:[#allocation5 + $0x14] sm:$0xf]
        %v314 = vld [vmem:[#allocation5 + $0x18] sm:$0xf]
        %v315 = vld [vmem:[#allocation5 + $0x1c] sm:$0xf]
        %v316 = vld [vmem:[#allocation5 + $0x20] sm:$0xf]
        %v317 = vld [vmem:[#allocation5 + $0x24] sm:$0xf]
        %v318 = vld [vmem:[#allocation5 + $0x28] sm:$0xf]
        %v319 = vld [vmem:[#allocation5 + $0x2c] sm:$0xf]
        %v320 = vld [vmem:[#allocation5 + $0x30] sm:$0xf]
        %v321 = vld [vmem:[#allocation5 + $0x34] sm:$0xf]
        %v322 = vld [vmem:[#allocation5 + $0x38] sm:$0xf]
        %v323 = vld [vmem:[#allocation5 + $0x3c] sm:$0xf]
        %v452 = vunpack.c.l.b16 %v180
        %v453 = vunpack.c.l.b16 %v181
        %v454 = vunpack.c.l.b16 %v182
        %v455 = vunpack.c.l.b16 %v183
        %v456 = vunpack.c.l.b16 %v184
        %v457 = vunpack.c.l.b16 %v185
        %v458 = vunpack.c.l.b16 %v186
        %v459 = vunpack.c.l.b16 %v187
        %v460 = vunpack.c.l.b16 %v188
        %v461 = vunpack.c.l.b16 %v189
        %v462 = vunpack.c.l.b16 %v190
        %v463 = vunpack.c.l.b16 %v191
        %v464 = vunpack.c.l.b16 %v192
        %v465 = vunpack.c.l.b16 %v193
        %v466 = vunpack.c.l.b16 %v194
        %v467 = vunpack.c.l.b16 %v195
        %v468 = vunpack.c.l.b16 %v196
        %v469 = vunpack.c.l.b16 %v197
        %v470 = vunpack.c.l.b16 %v198
        %v471 = vunpack.c.l.b16 %v199
        %v472 = vunpack.c.l.b16 %v200
        %v473 = vunpack.c.l.b16 %v201
        %v474 = vunpack.c.l.b16 %v202
        %v475 = vunpack.c.l.b16 %v203
        %v476 = vunpack.c.l.b16 %v204
        %v477 = vunpack.c.l.b16 %v205
        %v478 = vunpack.c.l.b16 %v206
        %v479 = vunpack.c.l.b16 %v207
        %v480 = vunpack.c.l.b16 %v208
        %v481 = vunpack.c.l.b16 %v209
        %v482 = vunpack.c.l.b16 %v210
        %v483 = vunpack.c.l.b16 %v211
        %v484 = vunpack.c.l.b16 %v212
        %v485 = vunpack.c.l.b16 %v213
        %v486 = vunpack.c.l.b16 %v214
        %v487 = vunpack.c.l.b16 %v215
        %v488 = vunpack.c.l.b16 %v216
        %v489 = vunpack.c.l.b16 %v217
        %v490 = vunpack.c.l.b16 %v218
        %v491 = vunpack.c.l.b16 %v219
        %v492 = vunpack.c.l.b16 %v220
        %v493 = vunpack.c.l.b16 %v221
        %v494 = vunpack.c.l.b16 %v222
        %v495 = vunpack.c.l.b16 %v223
        %v496 = vunpack.c.l.b16 %v224
        %v497 = vunpack.c.l.b16 %v225
        %v498 = vunpack.c.l.b16 %v226
        %v499 = vunpack.c.l.b16 %v227
        %v500 = vunpack.c.l.b16 %v228
        %v501 = vunpack.c.l.b16 %v229
        %v502 = vunpack.c.l.b16 %v230
        %v503 = vunpack.c.l.b16 %v231
        %v504 = vunpack.c.l.b16 %v232
        %v505 = vunpack.c.l.b16 %v233
        %v506 = vunpack.c.l.b16 %v234
        %v507 = vunpack.c.l.b16 %v235
        %v508 = vunpack.c.l.b16 %v236
        %v509 = vunpack.c.l.b16 %v237
        %v510 = vunpack.c.l.b16 %v238
        %v511 = vunpack.c.l.b16 %v239
        %v512 = vunpack.c.l.b16 %v240
        %v513 = vunpack.c.l.b16 %v241
        %v514 = vunpack.c.l.b16 %v242
        %v515 = vunpack.c.l.b16 %v243
        %v516 = vunpack.c.l.b16 %v244
        %v517 = vunpack.c.l.b16 %v245
        %v518 = vunpack.c.l.b16 %v246
        %v519 = vunpack.c.l.b16 %v247
        %v520 = vunpack.c.l.b16 %v248
        %v521 = vunpack.c.l.b16 %v249
        %v522 = vunpack.c.l.b16 %v250
        %v523 = vunpack.c.l.b16 %v251
        %v524 = vunpack.c.l.b16 %v252
        %v525 = vunpack.c.l.b16 %v253
        %v526 = vunpack.c.l.b16 %v254
        %v527 = vunpack.c.l.b16 %v255
        %v528 = vunpack.c.l.b16 %v256
        %v529 = vunpack.c.l.b16 %v257
        %v530 = vunpack.c.l.b16 %v258
        %v531 = vunpack.c.l.b16 %v259
        %v532 = vunpack.c.l.b16 %v260
        %v533 = vunpack.c.l.b16 %v261
        %v534 = vunpack.c.l.b16 %v262
        %v535 = vunpack.c.l.b16 %v263
        %v536 = vunpack.c.l.b16 %v264
        %v537 = vunpack.c.l.b16 %v265
        %v538 = vunpack.c.l.b16 %v266
        %v539 = vunpack.c.l.b16 %v267
        %v540 = vunpack.c.l.b16 %v268
        %v541 = vunpack.c.l.b16 %v269
        %v542 = vunpack.c.l.b16 %v270
        %v543 = vunpack.c.l.b16 %v271
        %v544 = vunpack.c.l.b16 %v272
        %v545 = vunpack.c.l.b16 %v273
        %v546 = vunpack.c.l.b16 %v274
        %v547 = vunpack.c.l.b16 %v275
        %v548 = vunpack.c.l.b16 %v276
        %v549 = vunpack.c.l.b16 %v277
        %v550 = vunpack.c.l.b16 %v278
        %v551 = vunpack.c.l.b16 %v279
        %v552 = vunpack.c.l.b16 %v280
        %v553 = vunpack.c.l.b16 %v281
        %v554 = vunpack.c.l.b16 %v282
        %v555 = vunpack.c.l.b16 %v283
        %v556 = vunpack.c.l.b16 %v284
        %v557 = vunpack.c.l.b16 %v285
        %v558 = vunpack.c.l.b16 %v286
        %v559 = vunpack.c.l.b16 %v287
        %v560 = vunpack.c.l.b16 %v288
        %v561 = vunpack.c.l.b16 %v289
        %v562 = vunpack.c.l.b16 %v290
        %v563 = vunpack.c.l.b16 %v291
        %v564 = vunpack.c.l.b16 %v292
        %v565 = vunpack.c.l.b16 %v293
        %v566 = vunpack.c.l.b16 %v294
        %v567 = vunpack.c.l.b16 %v295
        %v568 = vunpack.c.l.b16 %v296
        %v569 = vunpack.c.l.b16 %v297
        %v570 = vunpack.c.l.b16 %v298
        %v571 = vunpack.c.l.b16 %v299
        %v572 = vunpack.c.l.b16 %v300
        %v573 = vunpack.c.l.b16 %v301
        %v574 = vunpack.c.l.b16 %v302
        %v575 = vunpack.c.l.b16 %v303
        %v576 = vunpack.c.l.b16 %v304
        %v577 = vunpack.c.l.b16 %v305
        %v578 = vunpack.c.l.b16 %v306
        %v579 = vunpack.c.l.b16 %v307
        %v580 = vpack.c.b16 %v453, %v452
        %v581 = vpack.c.b16 %v455, %v454
        %v582 = vpack.c.b16 %v457, %v456
        %v583 = vpack.c.b16 %v459, %v458
        %v584 = vpack.c.b16 %v461, %v460
        %v585 = vpack.c.b16 %v463, %v462
        %v586 = vpack.c.b16 %v465, %v464
        %v587 = vpack.c.b16 %v467, %v466
        %v588 = vpack.c.b16 %v469, %v468
        %v589 = vpack.c.b16 %v471, %v470
        %v590 = vpack.c.b16 %v473, %v472
        %v591 = vpack.c.b16 %v475, %v474
        %v592 = vpack.c.b16 %v477, %v476
        %v593 = vpack.c.b16 %v479, %v478
        %v594 = vpack.c.b16 %v481, %v480
        %v595 = vpack.c.b16 %v483, %v482
        %v596 = vpack.c.b16 %v485, %v484
        %v597 = vpack.c.b16 %v487, %v486
        %v598 = vpack.c.b16 %v489, %v488
        %v599 = vpack.c.b16 %v491, %v490
        %v600 = vpack.c.b16 %v493, %v492
        %v601 = vpack.c.b16 %v495, %v494
        %v602 = vpack.c.b16 %v497, %v496
        %v603 = vpack.c.b16 %v499, %v498
        %v604 = vpack.c.b16 %v501, %v500
        %v605 = vpack.c.b16 %v503, %v502
        %v606 = vpack.c.b16 %v505, %v504
        %v607 = vpack.c.b16 %v507, %v506
        %v608 = vpack.c.b16 %v509, %v508
        %v609 = vpack.c.b16 %v511, %v510
        %v610 = vpack.c.b16 %v513, %v512
        %v611 = vpack.c.b16 %v515, %v514
        %v612 = vpack.c.b16 %v517, %v516
        %v613 = vpack.c.b16 %v519, %v518
        %v614 = vpack.c.b16 %v521, %v520
        %v615 = vpack.c.b16 %v523, %v522
        %v616 = vpack.c.b16 %v525, %v524
        %v617 = vpack.c.b16 %v527, %v526
        %v618 = vpack.c.b16 %v529, %v528
        %v619 = vpack.c.b16 %v531, %v530
        %v620 = vpack.c.b16 %v533, %v532
        %v621 = vpack.c.b16 %v535, %v534
        %v622 = vpack.c.b16 %v537, %v536
        %v623 = vpack.c.b16 %v539, %v538
        %v624 = vpack.c.b16 %v541, %v540
        %v625 = vpack.c.b16 %v543, %v542
        %v626 = vpack.c.b16 %v545, %v544
        %v627 = vpack.c.b16 %v547, %v546
        %v628 = vpack.c.b16 %v549, %v548
        %v629 = vpack.c.b16 %v551, %v550
        %v630 = vpack.c.b16 %v553, %v552
        %v631 = vpack.c.b16 %v555, %v554
        %v632 = vpack.c.b16 %v557, %v556
        %v633 = vpack.c.b16 %v559, %v558
        %v634 = vpack.c.b16 %v561, %v560
        %v635 = vpack.c.b16 %v563, %v562
        %v636 = vpack.c.b16 %v565, %v564
        %v637 = vpack.c.b16 %v567, %v566
        %v638 = vpack.c.b16 %v569, %v568
        %v639 = vpack.c.b16 %v571, %v570
        %v640 = vpack.c.b16 %v573, %v572
        %v641 = vpack.c.b16 %v575, %v574
        %v642 = vpack.c.b16 %v577, %v576
        %v643 = vpack.c.b16 %v579, %v578
        %v724 = vunpack.c.l.b16 %v308
        %v725 = vunpack.c.l.b16 %v309
        %v726 = vunpack.c.l.b16 %v310
        %v727 = vunpack.c.l.b16 %v311
        %v728 = vunpack.c.l.b16 %v312
        %v729 = vunpack.c.l.b16 %v313
        %v730 = vunpack.c.l.b16 %v314
        %v731 = vunpack.c.l.b16 %v315
        %v732 = vunpack.c.l.b16 %v316
        %v733 = vunpack.c.l.b16 %v317
        %v734 = vunpack.c.l.b16 %v318
        %v735 = vunpack.c.l.b16 %v319
        %v736 = vunpack.c.l.b16 %v320
        %v737 = vunpack.c.l.b16 %v321
        %v738 = vunpack.c.l.b16 %v322
        %v739 = vunpack.c.l.b16 %v323
        %v740 = vpack.c.b16 %v725, %v724
        %v741 = vpack.c.b16 %v727, %v726
        %v742 = vpack.c.b16 %v729, %v728
        %v743 = vpack.c.b16 %v731, %v730
        %v744 = vpack.c.b16 %v733, %v732
        %v745 = vpack.c.b16 %v735, %v734
        %v746 = vpack.c.b16 %v737, %v736
        %v747 = vpack.c.b16 %v739, %v738
        %756 = vmatprep.subr.bf16.mxu0 0
        %757 = vmatpush1.bf16.msra.mxu0 %v740
        %758 = vmatprep.subr.bf16.mxu0 0
        %759 = vmatpush1.bf16.msra.mxu0 %v741
        %760 = vmatprep.subr.bf16.mxu0 0
        %761 = vmatpush1.bf16.msra.mxu0 %v742
        %762 = vmatprep.subr.bf16.mxu0 0
        %763 = vmatpush1.bf16.msra.mxu0 %v743
        %764 = vmatprep.subr.bf16.mxu0 0
        %765 = vmatpush1.bf16.msra.mxu0 %v744
        %766 = vmatprep.subr.bf16.mxu0 0
        %767 = vmatpush1.bf16.msra.mxu0 %v745
        %768 = vmatprep.subr.bf16.mxu0 0
        %769 = vmatpush1.bf16.msra.mxu0 %v746
        %770 = vmatprep.subr.bf16.mxu0 0
        %771 = vmatpush1.bf16.msra.mxu0 %v747
        %772 = vmatprep.subr.bf16.mxu0 0
        %773 = vmatpush1.bf16.msra.mxu0 0
        %774 = vmatprep.subr.bf16.mxu0 0
        %775 = vmatpush1.bf16.msra.mxu0 0
        %776 = vmatprep.subr.bf16.mxu0 0
        %777 = vmatpush1.bf16.msra.mxu0 0
        %778 = vmatprep.subr.bf16.mxu0 0
        %779 = vmatpush1.bf16.msra.mxu0 0
        %780 = vmatprep.subr.bf16.mxu0 0
        %781 = vmatpush1.bf16.msra.mxu0 0
        %782 = vmatprep.subr.bf16.mxu0 0
        %783 = vmatpush1.bf16.msra.mxu0 0
        %784 = vmatprep.subr.bf16.mxu0 0
        %785 = vmatpush1.bf16.msra.mxu0 0
        %786 = vmatprep.subr.bf16.mxu0 0
        %787 = vmatpush1.bf16.msra.mxu0 0
        %788 = vmatprep.mubr.bf16.mxu0 0
        %789 = vmatmul.mubr.bf16.gmra.mrb[0].mxu0 %v580
        %v790 = vpop.f32.mrb[0].mxu0
        %v791 = vadd.f32 0.0, %v790
        %v792 = vpop.f32.mrb[0].mxu0
        %v793 = vpop.f32.mrb[0].mxu0
        %v794 = vadd.f32 0.0, %v793
        %v795 = vpop.f32.mrb[0].mxu0
        %796 = vmatprep.mubr.bf16.mxu0 0
        %797 = vmatmul.mubr.bf16.gmra.mrb[0].mxu0 %v581
        %v798 = vpop.f32.mrb[0].mxu0
        %v799 = vadd.f32 0.0, %v798
        %v800 = vpop.f32.mrb[0].mxu0
        %v801 = vpop.f32.mrb[0].mxu0
        %v802 = vadd.f32 0.0, %v801
        %v803 = vpop.f32.mrb[0].mxu0
        %804 = vmatprep.mubr.bf16.mxu0 0
        %805 = vmatmul.mubr.bf16.gmra.mrb[0].mxu0 %v582
        %v806 = vpop.f32.mrb[0].mxu0
        %v807 = vadd.f32 0.0, %v806
        %v808 = vpop.f32.mrb[0].mxu0
        %v809 = vpop.f32.mrb[0].mxu0
        %v810 = vadd.f32 0.0, %v809
        %v811 = vpop.f32.mrb[0].mxu0
        %812 = vmatprep.mubr.bf16.mxu0 0
        %813 = vmatmul.mubr.bf16.gmra.mrb[0].mxu0 %v583
        %v814 = vpop.f32.mrb[0].mxu0
        %v815 = vadd.f32 0.0, %v814
        %v816 = vpop.f32.mrb[0].mxu0
        %v817 = vpop.f32.mrb[0].mxu0
        %v818 = vadd.f32 0.0, %v817
        %v819 = vpop.f32.mrb[0].mxu0
        %820 = vmatprep.mubr.bf16.mxu0 0
        %821 = vmatmul.mubr.bf16.gmra.mrb[0].mxu0 %v584
        %v822 = vpop.f32.mrb[0].mxu0
        %v823 = vadd.f32 0.0, %v822
        %v824 = vpop.f32.mrb[0].mxu0
        %v825 = vpop.f32.mrb[0].mxu0
        %v826 = vadd.f32 0.0, %v825
        %v827 = vpop.f32.mrb[0].mxu0
        %828 = vmatprep.mubr.bf16.mxu0 0
        %829 = vmatmul.mubr.bf16.gmra.mrb[0].mxu0 %v585
        %v830 = vpop.f32.mrb[0].mxu0
        %v831 = vadd.f32 0.0, %v830
        %v832 = vpop.f32.mrb[0].mxu0
        %v833 = vpop.f32.mrb[0].mxu0
        %v834 = vadd.f32 0.0, %v833
        %v835 = vpop.f32.mrb[0].mxu0
        %836 = vmatprep.mubr.bf16.mxu0 0
        %837 = vmatmul.mubr.bf16.gmra.mrb[0].mxu0 %v586
        %v838 = vpop.f32.mrb[0].mxu0
        %v839 = vadd.f32 0.0, %v838
        %v840 = vpop.f32.mrb[0].mxu0
        %v841 = vpop.f32.mrb[0].mxu0
        %v842 = vadd.f32 0.0, %v841
        %v843 = vpop.f32.mrb[0].mxu0
        %844 = vmatprep.mubr.bf16.mxu0 0
        %845 = vmatmul.mubr.bf16.gmra.mrb[0].mxu0 %v587
        %v846 = vpop.f32.mrb[0].mxu0
        %v847 = vadd.f32 0.0, %v846
        %v848 = vpop.f32.mrb[0].mxu0
        %v849 = vpop.f32.mrb[0].mxu0
        %v850 = vadd.f32 0.0, %v849
        %v851 = vpop.f32.mrb[0].mxu0
        %852 = vmatprep.mubr.bf16.mxu0 0
        %853 = vmatmul.mubr.bf16.gmra.mrb[0].mxu0 %v588
        %v854 = vpop.f32.mrb[0].mxu0
        %v855 = vadd.f32 0.0, %v854
        %v856 = vpop.f32.mrb[0].mxu0
        %v857 = vpop.f32.mrb[0].mxu0
        %v858 = vadd.f32 0.0, %v857
        %v859 = vpop.f32.mrb[0].mxu0
        %860 = vmatprep.mubr.bf16.mxu0 0
        %861 = vmatmul.mubr.bf16.gmra.mrb[0].mxu0 %v589
        %v862 = vpop.f32.mrb[0].mxu0
        %v863 = vadd.f32 0.0, %v862
        %v864 = vpop.f32.mrb[0].mxu0
        %v865 = vpop.f32.mrb[0].mxu0
        %v866 = vadd.f32 0.0, %v865
        %v867 = vpop.f32.mrb[0].mxu0
        %868 = vmatprep.mubr.bf16.mxu0 0
        %869 = vmatmul.mubr.bf16.gmra.mrb[0].mxu0 %v590
        %v870 = vpop.f32.mrb[0].mxu0
        %v871 = vadd.f32 0.0, %v870
        %v872 = vpop.f32.mrb[0].mxu0
        %v873 = vpop.f32.mrb[0].mxu0
        %v874 = vadd.f32 0.0, %v873
        %v875 = vpop.f32.mrb[0].mxu0
        %876 = vmatprep.mubr.bf16.mxu0 0
        %877 = vmatmul.mubr.bf16.gmra.mrb[0].mxu0 %v591
        %v878 = vpop.f32.mrb[0].mxu0
        %v879 = vadd.f32 0.0, %v878
        %v880 = vpop.f32.mrb[0].mxu0
        %v881 = vpop.f32.mrb[0].mxu0
        %v882 = vadd.f32 0.0, %v881
        %v883 = vpop.f32.mrb[0].mxu0
        %884 = vmatprep.mubr.bf16.mxu0 0
        %885 = vmatmul.mubr.bf16.gmra.mrb[0].mxu0 %v592
        %v886 = vpop.f32.mrb[0].mxu0
        %v887 = vadd.f32 0.0, %v886
        %v888 = vpop.f32.mrb[0].mxu0
        %v889 = vpop.f32.mrb[0].mxu0
        %v890 = vadd.f32 0.0, %v889
        %v891 = vpop.f32.mrb[0].mxu0
        %892 = vmatprep.mubr.bf16.mxu0 0
        %893 = vmatmul.mubr.bf16.gmra.mrb[0].mxu0 %v593
        %v894 = vpop.f32.mrb[0].mxu0
        %v895 = vadd.f32 0.0, %v894
        %v896 = vpop.f32.mrb[0].mxu0
        %v897 = vpop.f32.mrb[0].mxu0
        %v898 = vadd.f32 0.0, %v897
        %v899 = vpop.f32.mrb[0].mxu0
        %900 = vmatprep.mubr.bf16.mxu0 0
        %901 = vmatmul.mubr.bf16.gmra.mrb[0].mxu0 %v594
        %v902 = vpop.f32.mrb[0].mxu0
        %v903 = vadd.f32 0.0, %v902
        %v904 = vpop.f32.mrb[0].mxu0
        %v905 = vpop.f32.mrb[0].mxu0
        %v906 = vadd.f32 0.0, %v905
        %v907 = vpop.f32.mrb[0].mxu0
        %908 = vmatprep.mubr.bf16.mxu0 0
        %909 = vmatmul.mubr.bf16.gmra.mrb[0].mxu0 %v595
        %v910 = vpop.f32.mrb[0].mxu0
        %v911 = vadd.f32 0.0, %v910
        %v912 = vpop.f32.mrb[0].mxu0
        %v913 = vpop.f32.mrb[0].mxu0
        %v914 = vadd.f32 0.0, %v913
        %v915 = vpop.f32.mrb[0].mxu0
        %916 = vmatprep.mubr.bf16.mxu0 0
        %917 = vmatmul.mubr.bf16.gmra.mrb[0].mxu0 %v596
        %v918 = vpop.f32.mrb[0].mxu0
        %v919 = vadd.f32 0.0, %v918
        %v920 = vpop.f32.mrb[0].mxu0
        %v921 = vpop.f32.mrb[0].mxu0
        %v922 = vadd.f32 0.0, %v921
        %v923 = vpop.f32.mrb[0].mxu0
        %924 = vmatprep.mubr.bf16.mxu0 0
        %925 = vmatmul.mubr.bf16.gmra.mrb[0].mxu0 %v597
        %v926 = vpop.f32.mrb[0].mxu0
        %v927 = vadd.f32 0.0, %v926
        %v928 = vpop.f32.mrb[0].mxu0
        %v929 = vpop.f32.mrb[0].mxu0
        %v930 = vadd.f32 0.0, %v929
        %v931 = vpop.f32.mrb[0].mxu0
        %932 = vmatprep.mubr.bf16.mxu0 0
        %933 = vmatmul.mubr.bf16.gmra.mrb[0].mxu0 %v598
        %v934 = vpop.f32.mrb[0].mxu0
        %v935 = vadd.f32 0.0, %v934
        %v936 = vpop.f32.mrb[0].mxu0
        %v937 = vpop.f32.mrb[0].mxu0
        %v938 = vadd.f32 0.0, %v937
        %v939 = vpop.f32.mrb[0].mxu0
        %940 = vmatprep.mubr.bf16.mxu0 0
        %941 = vmatmul.mubr.bf16.gmra.mrb[0].mxu0 %v599
        %v942 = vpop.f32.mrb[0].mxu0
        %v943 = vadd.f32 0.0, %v942
        %v944 = vpop.f32.mrb[0].mxu0
        %v945 = vpop.f32.mrb[0].mxu0
        %v946 = vadd.f32 0.0, %v945
        %v947 = vpop.f32.mrb[0].mxu0
        %948 = vmatprep.mubr.bf16.mxu0 0
        %949 = vmatmul.mubr.bf16.gmra.mrb[0].mxu0 %v600
        %v950 = vpop.f32.mrb[0].mxu0
        %v951 = vadd.f32 0.0, %v950
        %v952 = vpop.f32.mrb[0].mxu0
        %v953 = vpop.f32.mrb[0].mxu0
        %v954 = vadd.f32 0.0, %v953
        %v955 = vpop.f32.mrb[0].mxu0
        %956 = vmatprep.mubr.bf16.mxu0 0
        %957 = vmatmul.mubr.bf16.gmra.mrb[0].mxu0 %v601
        %v958 = vpop.f32.mrb[0].mxu0
        %v959 = vadd.f32 0.0, %v958
        %v960 = vpop.f32.mrb[0].mxu0
        %v961 = vpop.f32.mrb[0].mxu0
        %v962 = vadd.f32 0.0, %v961
        %v963 = vpop.f32.mrb[0].mxu0
        %964 = vmatprep.mubr.bf16.mxu0 0
        %965 = vmatmul.mubr.bf16.gmra.mrb[0].mxu0 %v602
        %v966 = vpop.f32.mrb[0].mxu0
        %v967 = vadd.f32 0.0, %v966
        %v968 = vpop.f32.mrb[0].mxu0
        %v969 = vpop.f32.mrb[0].mxu0
        %v970 = vadd.f32 0.0, %v969
        %v971 = vpop.f32.mrb[0].mxu0
        %972 = vmatprep.mubr.bf16.mxu0 0
        %973 = vmatmul.mubr.bf16.gmra.mrb[0].mxu0 %v603
        %v974 = vpop.f32.mrb[0].mxu0
        %v975 = vadd.f32 0.0, %v974
        %v976 = vpop.f32.mrb[0].mxu0
        %v977 = vpop.f32.mrb[0].mxu0
        %v978 = vadd.f32 0.0, %v977
        %v979 = vpop.f32.mrb[0].mxu0
        %980 = vmatprep.mubr.bf16.mxu0 0
        %981 = vmatmul.mubr.bf16.gmra.mrb[0].mxu0 %v604
        %v982 = vpop.f32.mrb[0].mxu0
        %v983 = vadd.f32 0.0, %v982
        %v984 = vpop.f32.mrb[0].mxu0
        %v985 = vpop.f32.mrb[0].mxu0
        %v986 = vadd.f32 0.0, %v985
        %v987 = vpop.f32.mrb[0].mxu0
        %988 = vmatprep.mubr.bf16.mxu0 0
        %989 = vmatmul.mubr.bf16.gmra.mrb[0].mxu0 %v605
        %v990 = vpop.f32.mrb[0].mxu0
        %v991 = vadd.f32 0.0, %v990
        %v992 = vpop.f32.mrb[0].mxu0
        %v993 = vpop.f32.mrb[0].mxu0
        %v994 = vadd.f32 0.0, %v993
        %v995 = vpop.f32.mrb[0].mxu0
        %996 = vmatprep.mubr.bf16.mxu0 0
        %997 = vmatmul.mubr.bf16.gmra.mrb[0].mxu0 %v606
        %v998 = vpop.f32.mrb[0].mxu0
        %v999 = vadd.f32 0.0, %v998
        %v1000 = vpop.f32.mrb[0].mxu0
        %v1001 = vpop.f32.mrb[0].mxu0
        %v1002 = vadd.f32 0.0, %v1001
        %v1003 = vpop.f32.mrb[0].mxu0
        %1004 = vmatprep.mubr.bf16.mxu0 0
        %1005 = vmatmul.mubr.bf16.gmra.mrb[0].mxu0 %v607
        %v1006 = vpop.f32.mrb[0].mxu0
        %v1007 = vadd.f32 0.0, %v1006
        %v1008 = vpop.f32.mrb[0].mxu0
        %v1009 = vpop.f32.mrb[0].mxu0
        %v1010 = vadd.f32 0.0, %v1009
        %v1011 = vpop.f32.mrb[0].mxu0
        %1012 = vmatprep.mubr.bf16.mxu0 0
        %1013 = vmatmul.mubr.bf16.gmra.mrb[0].mxu0 %v608
        %v1014 = vpop.f32.mrb[0].mxu0
        %v1015 = vadd.f32 0.0, %v1014
        %v1016 = vpop.f32.mrb[0].mxu0
        %v1017 = vpop.f32.mrb[0].mxu0
        %v1018 = vadd.f32 0.0, %v1017
        %v1019 = vpop.f32.mrb[0].mxu0
        %1020 = vmatprep.mubr.bf16.mxu0 0
        %1021 = vmatmul.mubr.bf16.gmra.mrb[0].mxu0 %v609
        %v1022 = vpop.f32.mrb[0].mxu0
        %v1023 = vadd.f32 0.0, %v1022
        %v1024 = vpop.f32.mrb[0].mxu0
        %v1025 = vpop.f32.mrb[0].mxu0
        %v1026 = vadd.f32 0.0, %v1025
        %v1027 = vpop.f32.mrb[0].mxu0
        %1028 = vmatprep.mubr.bf16.mxu0 0
        %1029 = vmatmul.mubr.bf16.gmra.mrb[0].mxu0 %v610
        %v1030 = vpop.f32.mrb[0].mxu0
        %v1031 = vadd.f32 0.0, %v1030
        %v1032 = vpop.f32.mrb[0].mxu0
        %v1033 = vpop.f32.mrb[0].mxu0
        %v1034 = vadd.f32 0.0, %v1033
        %v1035 = vpop.f32.mrb[0].mxu0
        %1036 = vmatprep.mubr.bf16.mxu0 0
        %1037 = vmatmul.mubr.bf16.gmra.mrb[0].mxu0 %v611
        %v1038 = vpop.f32.mrb[0].mxu0
        %v1039 = vadd.f32 0.0, %v1038
        %v1040 = vpop.f32.mrb[0].mxu0
        %v1041 = vpop.f32.mrb[0].mxu0
        %v1042 = vadd.f32 0.0, %v1041
        %v1043 = vpop.f32.mrb[0].mxu0
        %1044 = vmatprep.mubr.bf16.mxu0 0
        %1045 = vmatmul.mubr.bf16.gmra.mrb[0].mxu0 %v612
        %v1046 = vpop.f32.mrb[0].mxu0
        %v1047 = vadd.f32 0.0, %v1046
        %v1048 = vpop.f32.mrb[0].mxu0
        %v1049 = vpop.f32.mrb[0].mxu0
        %v1050 = vadd.f32 0.0, %v1049
        %v1051 = vpop.f32.mrb[0].mxu0
        %1052 = vmatprep.mubr.bf16.mxu0 0
        %1053 = vmatmul.mubr.bf16.gmra.mrb[0].mxu0 %v613
        %v1054 = vpop.f32.mrb[0].mxu0
        %v1055 = vadd.f32 0.0, %v1054
        %v1056 = vpop.f32.mrb[0].mxu0
        %v1057 = vpop.f32.mrb[0].mxu0
        %v1058 = vadd.f32 0.0, %v1057
        %v1059 = vpop.f32.mrb[0].mxu0
        %1060 = vmatprep.mubr.bf16.mxu0 0
        %1061 = vmatmul.mubr.bf16.gmra.mrb[0].mxu0 %v614
        %v1062 = vpop.f32.mrb[0].mxu0
        %v1063 = vadd.f32 0.0, %v1062
        %v1064 = vpop.f32.mrb[0].mxu0
        %v1065 = vpop.f32.mrb[0].mxu0
        %v1066 = vadd.f32 0.0, %v1065
        %v1067 = vpop.f32.mrb[0].mxu0
        %1068 = vmatprep.mubr.bf16.mxu0 0
        %1069 = vmatmul.mubr.bf16.gmra.mrb[0].mxu0 %v615
        %v1070 = vpop.f32.mrb[0].mxu0
        %v1071 = vadd.f32 0.0, %v1070
        %v1072 = vpop.f32.mrb[0].mxu0
        %v1073 = vpop.f32.mrb[0].mxu0
        %v1074 = vadd.f32 0.0, %v1073
        %v1075 = vpop.f32.mrb[0].mxu0
        %1076 = vmatprep.mubr.bf16.mxu0 0
        %1077 = vmatmul.mubr.bf16.gmra.mrb[0].mxu0 %v616
        %v1078 = vpop.f32.mrb[0].mxu0
        %v1079 = vadd.f32 0.0, %v1078
        %v1080 = vpop.f32.mrb[0].mxu0
        %v1081 = vpop.f32.mrb[0].mxu0
        %v1082 = vadd.f32 0.0, %v1081
        %v1083 = vpop.f32.mrb[0].mxu0
        %1084 = vmatprep.mubr.bf16.mxu0 0
        %1085 = vmatmul.mubr.bf16.gmra.mrb[0].mxu0 %v617
        %v1086 = vpop.f32.mrb[0].mxu0
        %v1087 = vadd.f32 0.0, %v1086
        %v1088 = vpop.f32.mrb[0].mxu0
        %v1089 = vpop.f32.mrb[0].mxu0
        %v1090 = vadd.f32 0.0, %v1089
        %v1091 = vpop.f32.mrb[0].mxu0
        %1092 = vmatprep.mubr.bf16.mxu0 0
        %1093 = vmatmul.mubr.bf16.gmra.mrb[0].mxu0 %v618
        %v1094 = vpop.f32.mrb[0].mxu0
        %v1095 = vadd.f32 0.0, %v1094
        %v1096 = vpop.f32.mrb[0].mxu0
        %v1097 = vpop.f32.mrb[0].mxu0
        %v1098 = vadd.f32 0.0, %v1097
        %v1099 = vpop.f32.mrb[0].mxu0
        %1100 = vmatprep.mubr.bf16.mxu0 0
        %1101 = vmatmul.mubr.bf16.gmra.mrb[0].mxu0 %v619
        %v1102 = vpop.f32.mrb[0].mxu0
        %v1103 = vadd.f32 0.0, %v1102
        %v1104 = vpop.f32.mrb[0].mxu0
        %v1105 = vpop.f32.mrb[0].mxu0
        %v1106 = vadd.f32 0.0, %v1105
        %v1107 = vpop.f32.mrb[0].mxu0
        %1108 = vmatprep.mubr.bf16.mxu0 0
        %1109 = vmatmul.mubr.bf16.gmra.mrb[0].mxu0 %v620
        %v1110 = vpop.f32.mrb[0].mxu0
        %v1111 = vadd.f32 0.0, %v1110
        %v1112 = vpop.f32.mrb[0].mxu0
        %v1113 = vpop.f32.mrb[0].mxu0
        %v1114 = vadd.f32 0.0, %v1113
        %v1115 = vpop.f32.mrb[0].mxu0
        %1116 = vmatprep.mubr.bf16.mxu0 0
        %1117 = vmatmul.mubr.bf16.gmra.mrb[0].mxu0 %v621
        %v1118 = vpop.f32.mrb[0].mxu0
        %v1119 = vadd.f32 0.0, %v1118
        %v1120 = vpop.f32.mrb[0].mxu0
        %v1121 = vpop.f32.mrb[0].mxu0
        %v1122 = vadd.f32 0.0, %v1121
        %v1123 = vpop.f32.mrb[0].mxu0
        %1124 = vmatprep.mubr.bf16.mxu0 0
        %1125 = vmatmul.mubr.bf16.gmra.mrb[0].mxu0 %v622
        %v1126 = vpop.f32.mrb[0].mxu0
        %v1127 = vadd.f32 0.0, %v1126
        %v1128 = vpop.f32.mrb[0].mxu0
        %v1129 = vpop.f32.mrb[0].mxu0
        %v1130 = vadd.f32 0.0, %v1129
        %v1131 = vpop.f32.mrb[0].mxu0
        %1132 = vmatprep.mubr.bf16.mxu0 0
        %1133 = vmatmul.mubr.bf16.gmra.mrb[0].mxu0 %v623
        %v1134 = vpop.f32.mrb[0].mxu0
        %v1135 = vadd.f32 0.0, %v1134
        %v1136 = vpop.f32.mrb[0].mxu0
        %v1137 = vpop.f32.mrb[0].mxu0
        %v1138 = vadd.f32 0.0, %v1137
        %v1139 = vpop.f32.mrb[0].mxu0
        %1140 = vmatprep.mubr.bf16.mxu0 0
        %1141 = vmatmul.mubr.bf16.gmra.mrb[0].mxu0 %v624
        %v1142 = vpop.f32.mrb[0].mxu0
        %v1143 = vadd.f32 0.0, %v1142
        %v1144 = vpop.f32.mrb[0].mxu0
        %v1145 = vpop.f32.mrb[0].mxu0
        %v1146 = vadd.f32 0.0, %v1145
        %v1147 = vpop.f32.mrb[0].mxu0
        %1148 = vmatprep.mubr.bf16.mxu0 0
        %1149 = vmatmul.mubr.bf16.gmra.mrb[0].mxu0 %v625
        %v1150 = vpop.f32.mrb[0].mxu0
        %v1151 = vadd.f32 0.0, %v1150
        %v1152 = vpop.f32.mrb[0].mxu0
        %v1153 = vpop.f32.mrb[0].mxu0
        %v1154 = vadd.f32 0.0, %v1153
        %v1155 = vpop.f32.mrb[0].mxu0
        %1156 = vmatprep.mubr.bf16.mxu0 0
        %1157 = vmatmul.mubr.bf16.gmra.mrb[0].mxu0 %v626
        %v1158 = vpop.f32.mrb[0].mxu0
        %v1159 = vadd.f32 0.0, %v1158
        %v1160 = vpop.f32.mrb[0].mxu0
        %v1161 = vpop.f32.mrb[0].mxu0
        %v1162 = vadd.f32 0.0, %v1161
        %v1163 = vpop.f32.mrb[0].mxu0
        %1164 = vmatprep.mubr.bf16.mxu0 0
        %1165 = vmatmul.mubr.bf16.gmra.mrb[0].mxu0 %v627
        %v1166 = vpop.f32.mrb[0].mxu0
        %v1167 = vadd.f32 0.0, %v1166
        %v1168 = vpop.f32.mrb[0].mxu0
        %v1169 = vpop.f32.mrb[0].mxu0
        %v1170 = vadd.f32 0.0, %v1169
        %v1171 = vpop.f32.mrb[0].mxu0
        %1172 = vmatprep.mubr.bf16.mxu0 0
        %1173 = vmatmul.mubr.bf16.gmra.mrb[0].mxu0 %v628
        %v1174 = vpop.f32.mrb[0].mxu0
        %v1175 = vadd.f32 0.0, %v1174
        %v1176 = vpop.f32.mrb[0].mxu0
        %v1177 = vpop.f32.mrb[0].mxu0
        %v1178 = vadd.f32 0.0, %v1177
        %v1179 = vpop.f32.mrb[0].mxu0
        %1180 = vmatprep.mubr.bf16.mxu0 0
        %1181 = vmatmul.mubr.bf16.gmra.mrb[0].mxu0 %v629
        %v1182 = vpop.f32.mrb[0].mxu0
        %v1183 = vadd.f32 0.0, %v1182
        %v1184 = vpop.f32.mrb[0].mxu0
        %v1185 = vpop.f32.mrb[0].mxu0
        %v1186 = vadd.f32 0.0, %v1185
        %v1187 = vpop.f32.mrb[0].mxu0
        %1188 = vmatprep.mubr.bf16.mxu0 0
        %1189 = vmatmul.mubr.bf16.gmra.mrb[0].mxu0 %v630
        %v1190 = vpop.f32.mrb[0].mxu0
        %v1191 = vadd.f32 0.0, %v1190
        %v1192 = vpop.f32.mrb[0].mxu0
        %v1193 = vpop.f32.mrb[0].mxu0
        %v1194 = vadd.f32 0.0, %v1193
        %v1195 = vpop.f32.mrb[0].mxu0
        %1196 = vmatprep.mubr.bf16.mxu0 0
        %1197 = vmatmul.mubr.bf16.gmra.mrb[0].mxu0 %v631
        %v1198 = vpop.f32.mrb[0].mxu0
        %v1199 = vadd.f32 0.0, %v1198
        %v1200 = vpop.f32.mrb[0].mxu0
        %v1201 = vpop.f32.mrb[0].mxu0
        %v1202 = vadd.f32 0.0, %v1201
        %v1203 = vpop.f32.mrb[0].mxu0
        %1204 = vmatprep.mubr.bf16.mxu0 0
        %1205 = vmatmul.mubr.bf16.gmra.mrb[0].mxu0 %v632
        %v1206 = vpop.f32.mrb[0].mxu0
        %v1207 = vadd.f32 0.0, %v1206
        %v1208 = vpop.f32.mrb[0].mxu0
        %v1209 = vpop.f32.mrb[0].mxu0
        %v1210 = vadd.f32 0.0, %v1209
        %v1211 = vpop.f32.mrb[0].mxu0
        %1212 = vmatprep.mubr.bf16.mxu0 0
        %1213 = vmatmul.mubr.bf16.gmra.mrb[0].mxu0 %v633
        %v1214 = vpop.f32.mrb[0].mxu0
        %v1215 = vadd.f32 0.0, %v1214
        %v1216 = vpop.f32.mrb[0].mxu0
        %v1217 = vpop.f32.mrb[0].mxu0
        %v1218 = vadd.f32 0.0, %v1217
        %v1219 = vpop.f32.mrb[0].mxu0
        %1220 = vmatprep.mubr.bf16.mxu0 0
        %1221 = vmatmul.mubr.bf16.gmra.mrb[0].mxu0 %v634
        %v1222 = vpop.f32.mrb[0].mxu0
        %v1223 = vadd.f32 0.0, %v1222
        %v1224 = vpop.f32.mrb[0].mxu0
        %v1225 = vpop.f32.mrb[0].mxu0
        %v1226 = vadd.f32 0.0, %v1225
        %v1227 = vpop.f32.mrb[0].mxu0
        %1228 = vmatprep.mubr.bf16.mxu0 0
        %1229 = vmatmul.mubr.bf16.gmra.mrb[0].mxu0 %v635
        %v1230 = vpop.f32.mrb[0].mxu0
        %v1231 = vadd.f32 0.0, %v1230
        %v1232 = vpop.f32.mrb[0].mxu0
        %v1233 = vpop.f32.mrb[0].mxu0
        %v1234 = vadd.f32 0.0, %v1233
        %v1235 = vpop.f32.mrb[0].mxu0
        %1236 = vmatprep.mubr.bf16.mxu0 0
        %1237 = vmatmul.mubr.bf16.gmra.mrb[0].mxu0 %v636
        %v1238 = vpop.f32.mrb[0].mxu0
        %v1239 = vadd.f32 0.0, %v1238
        %v1240 = vpop.f32.mrb[0].mxu0
        %v1241 = vpop.f32.mrb[0].mxu0
        %v1242 = vadd.f32 0.0, %v1241
        %v1243 = vpop.f32.mrb[0].mxu0
        %1244 = vmatprep.mubr.bf16.mxu0 0
        %1245 = vmatmul.mubr.bf16.gmra.mrb[0].mxu0 %v637
        %v1246 = vpop.f32.mrb[0].mxu0
        %v1247 = vadd.f32 0.0, %v1246
        %v1248 = vpop.f32.mrb[0].mxu0
        %v1249 = vpop.f32.mrb[0].mxu0
        %v1250 = vadd.f32 0.0, %v1249
        %v1251 = vpop.f32.mrb[0].mxu0
        %1252 = vmatprep.mubr.bf16.mxu0 0
        %1253 = vmatmul.mubr.bf16.gmra.mrb[0].mxu0 %v638
        %v1254 = vpop.f32.mrb[0].mxu0
        %v1255 = vadd.f32 0.0, %v1254
        %v1256 = vpop.f32.mrb[0].mxu0
        %v1257 = vpop.f32.mrb[0].mxu0
        %v1258 = vadd.f32 0.0, %v1257
        %v1259 = vpop.f32.mrb[0].mxu0
        %1260 = vmatprep.mubr.bf16.mxu0 0
        %1261 = vmatmul.mubr.bf16.gmra.mrb[0].mxu0 %v639
        %v1262 = vpop.f32.mrb[0].mxu0
        %v1263 = vadd.f32 0.0, %v1262
        %v1264 = vpop.f32.mrb[0].mxu0
        %v1265 = vpop.f32.mrb[0].mxu0
        %v1266 = vadd.f32 0.0, %v1265
        %v1267 = vpop.f32.mrb[0].mxu0
        %1268 = vmatprep.mubr.bf16.mxu0 0
        %1269 = vmatmul.mubr.bf16.gmra.mrb[0].mxu0 %v640
        %v1270 = vpop.f32.mrb[0].mxu0
        %v1271 = vadd.f32 0.0, %v1270
        %v1272 = vpop.f32.mrb[0].mxu0
        %v1273 = vpop.f32.mrb[0].mxu0
        %v1274 = vadd.f32 0.0, %v1273
        %v1275 = vpop.f32.mrb[0].mxu0
        %1276 = vmatprep.mubr.bf16.mxu0 0
        %1277 = vmatmul.mubr.bf16.gmra.mrb[0].mxu0 %v641
        %v1278 = vpop.f32.mrb[0].mxu0
        %v1279 = vadd.f32 0.0, %v1278
        %v1280 = vpop.f32.mrb[0].mxu0
        %v1281 = vpop.f32.mrb[0].mxu0
        %v1282 = vadd.f32 0.0, %v1281
        %v1283 = vpop.f32.mrb[0].mxu0
        %1284 = vmatprep.mubr.bf16.mxu0 0
        %1285 = vmatmul.mubr.bf16.gmra.mrb[0].mxu0 %v642
        %v1286 = vpop.f32.mrb[0].mxu0
        %v1287 = vadd.f32 0.0, %v1286
        %v1288 = vpop.f32.mrb[0].mxu0
        %v1289 = vpop.f32.mrb[0].mxu0
        %v1290 = vadd.f32 0.0, %v1289
        %v1291 = vpop.f32.mrb[0].mxu0
        %1292 = vmatprep.mubr.bf16.mxu0 0
        %1293 = vmatmul.mubr.bf16.gmra.mrb[0].mxu0 %v643
        %v1294 = vpop.f32.mrb[0].mxu0
        %v1295 = vadd.f32 0.0, %v1294
        %v1296 = vpop.f32.mrb[0].mxu0
        %v1297 = vpop.f32.mrb[0].mxu0
        %v1298 = vadd.f32 0.0, %v1297
        %v1299 = vpop.f32.mrb[0].mxu0
        %1300 = vdwg.mxu0
        %vm1301 = vcmp.gt.f32.partialorder %v791, 0.0
        %vm1302 = vcmp.gt.f32.partialorder %v794, 0.0
        %vm1303 = vcmp.gt.f32.partialorder %v799, 0.0
        %vm1304 = vcmp.gt.f32.partialorder %v802, 0.0
        %vm1305 = vcmp.gt.f32.partialorder %v807, 0.0
        %vm1306 = vcmp.gt.f32.partialorder %v810, 0.0
        %vm1307 = vcmp.gt.f32.partialorder %v815, 0.0
        %vm1308 = vcmp.gt.f32.partialorder %v818, 0.0
        %vm1309 = vcmp.gt.f32.partialorder %v823, 0.0
        %vm1310 = vcmp.gt.f32.partialorder %v826, 0.0
        %vm1311 = vcmp.gt.f32.partialorder %v831, 0.0
        %vm1312 = vcmp.gt.f32.partialorder %v834, 0.0
        %vm1313 = vcmp.gt.f32.partialorder %v839, 0.0
        %vm1314 = vcmp.gt.f32.partialorder %v842, 0.0
        %vm1315 = vcmp.gt.f32.partialorder %v847, 0.0
        %vm1316 = vcmp.gt.f32.partialorder %v850, 0.0
        %vm1317 = vcmp.gt.f32.partialorder %v855, 0.0
        %vm1318 = vcmp.gt.f32.partialorder %v858, 0.0
        %vm1319 = vcmp.gt.f32.partialorder %v863, 0.0
        %vm1320 = vcmp.gt.f32.partialorder %v866, 0.0
        %vm1321 = vcmp.gt.f32.partialorder %v871, 0.0
        %vm1322 = vcmp.gt.f32.partialorder %v874, 0.0
        %vm1323 = vcmp.gt.f32.partialorder %v879, 0.0
        %vm1324 = vcmp.gt.f32.partialorder %v882, 0.0
        %vm1325 = vcmp.gt.f32.partialorder %v887, 0.0
        %vm1326 = vcmp.gt.f32.partialorder %v890, 0.0
        %vm1327 = vcmp.gt.f32.partialorder %v895, 0.0
        %vm1328 = vcmp.gt.f32.partialorder %v898, 0.0
        %vm1329 = vcmp.gt.f32.partialorder %v903, 0.0
        %vm1330 = vcmp.gt.f32.partialorder %v906, 0.0
        %vm1331 = vcmp.gt.f32.partialorder %v911, 0.0
        %vm1332 = vcmp.gt.f32.partialorder %v914, 0.0
        %vm1333 = vcmp.gt.f32.partialorder %v919, 0.0
        %vm1334 = vcmp.gt.f32.partialorder %v922, 0.0
        %vm1335 = vcmp.gt.f32.partialorder %v927, 0.0
        %vm1336 = vcmp.gt.f32.partialorder %v930, 0.0
        %vm1337 = vcmp.gt.f32.partialorder %v935, 0.0
        %vm1338 = vcmp.gt.f32.partialorder %v938, 0.0
        %vm1339 = vcmp.gt.f32.partialorder %v943, 0.0
        %vm1340 = vcmp.gt.f32.partialorder %v946, 0.0
        %vm1341 = vcmp.gt.f32.partialorder %v951, 0.0
        %vm1342 = vcmp.gt.f32.partialorder %v954, 0.0
        %vm1343 = vcmp.gt.f32.partialorder %v959, 0.0
        %vm1344 = vcmp.gt.f32.partialorder %v962, 0.0
        %vm1345 = vcmp.gt.f32.partialorder %v967, 0.0
        %vm1346 = vcmp.gt.f32.partialorder %v970, 0.0
        %vm1347 = vcmp.gt.f32.partialorder %v975, 0.0
        %vm1348 = vcmp.gt.f32.partialorder %v978, 0.0
        %vm1349 = vcmp.gt.f32.partialorder %v983, 0.0
        %vm1350 = vcmp.gt.f32.partialorder %v986, 0.0
        %vm1351 = vcmp.gt.f32.partialorder %v991, 0.0
        %vm1352 = vcmp.gt.f32.partialorder %v994, 0.0
        %vm1353 = vcmp.gt.f32.partialorder %v999, 0.0
        %vm1354 = vcmp.gt.f32.partialorder %v1002, 0.0
        %vm1355 = vcmp.gt.f32.partialorder %v1007, 0.0
        %vm1356 = vcmp.gt.f32.partialorder %v1010, 0.0
        %vm1357 = vcmp.gt.f32.partialorder %v1015, 0.0
        %vm1358 = vcmp.gt.f32.partialorder %v1018, 0.0
        %vm1359 = vcmp.gt.f32.partialorder %v1023, 0.0
        %vm1360 = vcmp.gt.f32.partialorder %v1026, 0.0
        %vm1361 = vcmp.gt.f32.partialorder %v1031, 0.0
        %vm1362 = vcmp.gt.f32.partialorder %v1034, 0.0
        %vm1363 = vcmp.gt.f32.partialorder %v1039, 0.0
        %vm1364 = vcmp.gt.f32.partialorder %v1042, 0.0
        %vm1365 = vcmp.gt.f32.partialorder %v1047, 0.0
        %vm1366 = vcmp.gt.f32.partialorder %v1050, 0.0
        %vm1367 = vcmp.gt.f32.partialorder %v1055, 0.0
        %vm1368 = vcmp.gt.f32.partialorder %v1058, 0.0
        %vm1369 = vcmp.gt.f32.partialorder %v1063, 0.0
        %vm1370 = vcmp.gt.f32.partialorder %v1066, 0.0
        %vm1371 = vcmp.gt.f32.partialorder %v1071, 0.0
        %vm1372 = vcmp.gt.f32.partialorder %v1074, 0.0
        %vm1373 = vcmp.gt.f32.partialorder %v1079, 0.0
        %vm1374 = vcmp.gt.f32.partialorder %v1082, 0.0
        %vm1375 = vcmp.gt.f32.partialorder %v1087, 0.0
        %vm1376 = vcmp.gt.f32.partialorder %v1090, 0.0
        %vm1377 = vcmp.gt.f32.partialorder %v1095, 0.0
        %vm1378 = vcmp.gt.f32.partialorder %v1098, 0.0
        %vm1379 = vcmp.gt.f32.partialorder %v1103, 0.0
        %vm1380 = vcmp.gt.f32.partialorder %v1106, 0.0
        %vm1381 = vcmp.gt.f32.partialorder %v1111, 0.0
        %vm1382 = vcmp.gt.f32.partialorder %v1114, 0.0
        %vm1383 = vcmp.gt.f32.partialorder %v1119, 0.0
        %vm1384 = vcmp.gt.f32.partialorder %v1122, 0.0
        %vm1385 = vcmp.gt.f32.partialorder %v1127, 0.0
        %vm1386 = vcmp.gt.f32.partialorder %v1130, 0.0
        %vm1387 = vcmp.gt.f32.partialorder %v1135, 0.0
        %vm1388 = vcmp.gt.f32.partialorder %v1138, 0.0
        %vm1389 = vcmp.gt.f32.partialorder %v1143, 0.0
        %vm1390 = vcmp.gt.f32.partialorder %v1146, 0.0
        %vm1391 = vcmp.gt.f32.partialorder %v1151, 0.0
        %vm1392 = vcmp.gt.f32.partialorder %v1154, 0.0
        %vm1393 = vcmp.gt.f32.partialorder %v1159, 0.0
        %vm1394 = vcmp.gt.f32.partialorder %v1162, 0.0
        %vm1395 = vcmp.gt.f32.partialorder %v1167, 0.0
        %vm1396 = vcmp.gt.f32.partialorder %v1170, 0.0
        %vm1397 = vcmp.gt.f32.partialorder %v1175, 0.0
        %vm1398 = vcmp.gt.f32.partialorder %v1178, 0.0
        %vm1399 = vcmp.gt.f32.partialorder %v1183, 0.0
        %vm1400 = vcmp.gt.f32.partialorder %v1186, 0.0
        %vm1401 = vcmp.gt.f32.partialorder %v1191, 0.0
        %vm1402 = vcmp.gt.f32.partialorder %v1194, 0.0
        %vm1403 = vcmp.gt.f32.partialorder %v1199, 0.0
        %vm1404 = vcmp.gt.f32.partialorder %v1202, 0.0
        %vm1405 = vcmp.gt.f32.partialorder %v1207, 0.0
        %vm1406 = vcmp.gt.f32.partialorder %v1210, 0.0
        %vm1407 = vcmp.gt.f32.partialorder %v1215, 0.0
        %vm1408 = vcmp.gt.f32.partialorder %v1218, 0.0
        %vm1409 = vcmp.gt.f32.partialorder %v1223, 0.0
        %vm1410 = vcmp.gt.f32.partialorder %v1226, 0.0
        %vm1411 = vcmp.gt.f32.partialorder %v1231, 0.0
        %vm1412 = vcmp.gt.f32.partialorder %v1234, 0.0
        %vm1413 = vcmp.gt.f32.partialorder %v1239, 0.0
        %vm1414 = vcmp.gt.f32.partialorder %v1242, 0.0
        %vm1415 = vcmp.gt.f32.partialorder %v1247, 0.0
        %vm1416 = vcmp.gt.f32.partialorder %v1250, 0.0
        %vm1417 = vcmp.gt.f32.partialorder %v1255, 0.0
        %vm1418 = vcmp.gt.f32.partialorder %v1258, 0.0
        %vm1419 = vcmp.gt.f32.partialorder %v1263, 0.0
        %vm1420 = vcmp.gt.f32.partialorder %v1266, 0.0
        %vm1421 = vcmp.gt.f32.partialorder %v1271, 0.0
        %vm1422 = vcmp.gt.f32.partialorder %v1274, 0.0
        %vm1423 = vcmp.gt.f32.partialorder %v1279, 0.0
        %vm1424 = vcmp.gt.f32.partialorder %v1282, 0.0
        %vm1425 = vcmp.gt.f32.partialorder %v1287, 0.0
        %vm1426 = vcmp.gt.f32.partialorder %v1290, 0.0
        %vm1427 = vcmp.gt.f32.partialorder %v1295, 0.0
        %vm1428 = vcmp.gt.f32.partialorder %v1298, 0.0
        %v1429 = vmul.f32 %v791, 0.2
        %v1430 = vmul.f32 %v794, 0.2
        %v1431 = vmul.f32 %v799, 0.2
        %v1432 = vmul.f32 %v802, 0.2
        %v1433 = vmul.f32 %v807, 0.2
        %v1434 = vmul.f32 %v810, 0.2
        %v1435 = vmul.f32 %v815, 0.2
        %v1436 = vmul.f32 %v818, 0.2
        %v1437 = vmul.f32 %v823, 0.2
        %v1438 = vmul.f32 %v826, 0.2
        %v1439 = vmul.f32 %v831, 0.2
        %v1440 = vmul.f32 %v834, 0.2
        %v1441 = vmul.f32 %v839, 0.2
        %v1442 = vmul.f32 %v842, 0.2
        %v1443 = vmul.f32 %v847, 0.2
        %v1444 = vmul.f32 %v850, 0.2
        %v1445 = vmul.f32 %v855, 0.2
        %v1446 = vmul.f32 %v858, 0.2
        %v1447 = vmul.f32 %v863, 0.2
        %v1448 = vmul.f32 %v866, 0.2
        %v1449 = vmul.f32 %v871, 0.2
        %v1450 = vmul.f32 %v874, 0.2
        %v1451 = vmul.f32 %v879, 0.2
        %v1452 = vmul.f32 %v882, 0.2
        %v1453 = vmul.f32 %v887, 0.2
        %v1454 = vmul.f32 %v890, 0.2
        %v1455 = vmul.f32 %v895, 0.2
        %v1456 = vmul.f32 %v898, 0.2
        %v1457 = vmul.f32 %v903, 0.2
        %v1458 = vmul.f32 %v906, 0.2
        %v1459 = vmul.f32 %v911, 0.2
        %v1460 = vmul.f32 %v914, 0.2
        %v1461 = vmul.f32 %v919, 0.2
        %v1462 = vmul.f32 %v922, 0.2
        %v1463 = vmul.f32 %v927, 0.2
        %v1464 = vmul.f32 %v930, 0.2
        %v1465 = vmul.f32 %v935, 0.2
        %v1466 = vmul.f32 %v938, 0.2
        %v1467 = vmul.f32 %v943, 0.2
        %v1468 = vmul.f32 %v946, 0.2
        %v1469 = vmul.f32 %v951, 0.2
        %v1470 = vmul.f32 %v954, 0.2
        %v1471 = vmul.f32 %v959, 0.2
        %v1472 = vmul.f32 %v962, 0.2
        %v1473 = vmul.f32 %v967, 0.2
        %v1474 = vmul.f32 %v970, 0.2
        %v1475 = vmul.f32 %v975, 0.2
        %v1476 = vmul.f32 %v978, 0.2
        %v1477 = vmul.f32 %v983, 0.2
        %v1478 = vmul.f32 %v986, 0.2
        %v1479 = vmul.f32 %v991, 0.2
        %v1480 = vmul.f32 %v994, 0.2
        %v1481 = vmul.f32 %v999, 0.2
        %v1482 = vmul.f32 %v1002, 0.2
        %v1483 = vmul.f32 %v1007, 0.2
        %v1484 = vmul.f32 %v1010, 0.2
        %v1485 = vmul.f32 %v1015, 0.2
        %v1486 = vmul.f32 %v1018, 0.2
        %v1487 = vmul.f32 %v1023, 0.2
        %v1488 = vmul.f32 %v1026, 0.2
        %v1489 = vmul.f32 %v1031, 0.2
        %v1490 = vmul.f32 %v1034, 0.2
        %v1491 = vmul.f32 %v1039, 0.2
        %v1492 = vmul.f32 %v1042, 0.2
        %v1493 = vmul.f32 %v1047, 0.2
        %v1494 = vmul.f32 %v1050, 0.2
        %v1495 = vmul.f32 %v1055, 0.2
        %v1496 = vmul.f32 %v1058, 0.2
        %v1497 = vmul.f32 %v1063, 0.2
        %v1498 = vmul.f32 %v1066, 0.2
        %v1499 = vmul.f32 %v1071, 0.2
        %v1500 = vmul.f32 %v1074, 0.2
        %v1501 = vmul.f32 %v1079, 0.2
        %v1502 = vmul.f32 %v1082, 0.2
        %v1503 = vmul.f32 %v1087, 0.2
        %v1504 = vmul.f32 %v1090, 0.2
        %v1505 = vmul.f32 %v1095, 0.2
        %v1506 = vmul.f32 %v1098, 0.2
        %v1507 = vmul.f32 %v1103, 0.2
        %v1508 = vmul.f32 %v1106, 0.2
        %v1509 = vmul.f32 %v1111, 0.2
        %v1510 = vmul.f32 %v1114, 0.2
        %v1511 = vmul.f32 %v1119, 0.2
        %v1512 = vmul.f32 %v1122, 0.2
        %v1513 = vmul.f32 %v1127, 0.2
        %v1514 = vmul.f32 %v1130, 0.2
        %v1515 = vmul.f32 %v1135, 0.2
        %v1516 = vmul.f32 %v1138, 0.2
        %v1517 = vmul.f32 %v1143, 0.2
        %v1518 = vmul.f32 %v1146, 0.2
        %v1519 = vmul.f32 %v1151, 0.2
        %v1520 = vmul.f32 %v1154, 0.2
        %v1521 = vmul.f32 %v1159, 0.2
        %v1522 = vmul.f32 %v1162, 0.2
        %v1523 = vmul.f32 %v1167, 0.2
        %v1524 = vmul.f32 %v1170, 0.2
        %v1525 = vmul.f32 %v1175, 0.2
        %v1526 = vmul.f32 %v1178, 0.2
        %v1527 = vmul.f32 %v1183, 0.2
        %v1528 = vmul.f32 %v1186, 0.2
        %v1529 = vmul.f32 %v1191, 0.2
        %v1530 = vmul.f32 %v1194, 0.2
        %v1531 = vmul.f32 %v1199, 0.2
        %v1532 = vmul.f32 %v1202, 0.2
        %v1533 = vmul.f32 %v1207, 0.2
        %v1534 = vmul.f32 %v1210, 0.2
        %v1535 = vmul.f32 %v1215, 0.2
        %v1536 = vmul.f32 %v1218, 0.2
        %v1537 = vmul.f32 %v1223, 0.2
        %v1538 = vmul.f32 %v1226, 0.2
        %v1539 = vmul.f32 %v1231, 0.2
        %v1540 = vmul.f32 %v1234, 0.2
        %v1541 = vmul.f32 %v1239, 0.2
        %v1542 = vmul.f32 %v1242, 0.2
        %v1543 = vmul.f32 %v1247, 0.2
        %v1544 = vmul.f32 %v1250, 0.2
        %v1545 = vmul.f32 %v1255, 0.2
        %v1546 = vmul.f32 %v1258, 0.2
        %v1547 = vmul.f32 %v1263, 0.2
        %v1548 = vmul.f32 %v1266, 0.2
        %v1549 = vmul.f32 %v1271, 0.2
        %v1550 = vmul.f32 %v1274, 0.2
        %v1551 = vmul.f32 %v1279, 0.2
        %v1552 = vmul.f32 %v1282, 0.2
        %v1553 = vmul.f32 %v1287, 0.2
        %v1554 = vmul.f32 %v1290, 0.2
        %v1555 = vmul.f32 %v1295, 0.2
        %v1556 = vmul.f32 %v1298, 0.2
        %v1557 = vsel %vm1301, %v791, %v1429
        %v1558 = vsel %vm1302, %v794, %v1430
        %v1559 = vsel %vm1303, %v799, %v1431
        %v1560 = vsel %vm1304, %v802, %v1432
        %v1561 = vsel %vm1305, %v807, %v1433
        %v1562 = vsel %vm1306, %v810, %v1434
        %v1563 = vsel %vm1307, %v815, %v1435
        %v1564 = vsel %vm1308, %v818, %v1436
        %v1565 = vsel %vm1309, %v823, %v1437
        %v1566 = vsel %vm1310, %v826, %v1438
        %v1567 = vsel %vm1311, %v831, %v1439
        %v1568 = vsel %vm1312, %v834, %v1440
        %v1569 = vsel %vm1313, %v839, %v1441
        %v1570 = vsel %vm1314, %v842, %v1442
        %v1571 = vsel %vm1315, %v847, %v1443
        %v1572 = vsel %vm1316, %v850, %v1444
        %v1573 = vsel %vm1317, %v855, %v1445
        %v1574 = vsel %vm1318, %v858, %v1446
        %v1575 = vsel %vm1319, %v863, %v1447
        %v1576 = vsel %vm1320, %v866, %v1448
        %v1577 = vsel %vm1321, %v871, %v1449
        %v1578 = vsel %vm1322, %v874, %v1450
        %v1579 = vsel %vm1323, %v879, %v1451
        %v1580 = vsel %vm1324, %v882, %v1452
        %v1581 = vsel %vm1325, %v887, %v1453
        %v1582 = vsel %vm1326, %v890, %v1454
        %v1583 = vsel %vm1327, %v895, %v1455
        %v1584 = vsel %vm1328, %v898, %v1456
        %v1585 = vsel %vm1329, %v903, %v1457
        %v1586 = vsel %vm1330, %v906, %v1458
        %v1587 = vsel %vm1331, %v911, %v1459
        %v1588 = vsel %vm1332, %v914, %v1460
        %v1589 = vsel %vm1333, %v919, %v1461
        %v1590 = vsel %vm1334, %v922, %v1462
        %v1591 = vsel %vm1335, %v927, %v1463
        %v1592 = vsel %vm1336, %v930, %v1464
        %v1593 = vsel %vm1337, %v935, %v1465
        %v1594 = vsel %vm1338, %v938, %v1466
        %v1595 = vsel %vm1339, %v943, %v1467
        %v1596 = vsel %vm1340, %v946, %v1468
        %v1597 = vsel %vm1341, %v951, %v1469
        %v1598 = vsel %vm1342, %v954, %v1470
        %v1599 = vsel %vm1343, %v959, %v1471
        %v1600 = vsel %vm1344, %v962, %v1472
        %v1601 = vsel %vm1345, %v967, %v1473
        %v1602 = vsel %vm1346, %v970, %v1474
        %v1603 = vsel %vm1347, %v975, %v1475
        %v1604 = vsel %vm1348, %v978, %v1476
        %v1605 = vsel %vm1349, %v983, %v1477
        %v1606 = vsel %vm1350, %v986, %v1478
        %v1607 = vsel %vm1351, %v991, %v1479
        %v1608 = vsel %vm1352, %v994, %v1480
        %v1609 = vsel %vm1353, %v999, %v1481
        %v1610 = vsel %vm1354, %v1002, %v1482
        %v1611 = vsel %vm1355, %v1007, %v1483
        %v1612 = vsel %vm1356, %v1010, %v1484
        %v1613 = vsel %vm1357, %v1015, %v1485
        %v1614 = vsel %vm1358, %v1018, %v1486
        %v1615 = vsel %vm1359, %v1023, %v1487
        %v1616 = vsel %vm1360, %v1026, %v1488
        %v1617 = vsel %vm1361, %v1031, %v1489
        %v1618 = vsel %vm1362, %v1034, %v1490
        %v1619 = vsel %vm1363, %v1039, %v1491
        %v1620 = vsel %vm1364, %v1042, %v1492
        %v1621 = vsel %vm1365, %v1047, %v1493
        %v1622 = vsel %vm1366, %v1050, %v1494
        %v1623 = vsel %vm1367, %v1055, %v1495
        %v1624 = vsel %vm1368, %v1058, %v1496
        %v1625 = vsel %vm1369, %v1063, %v1497
        %v1626 = vsel %vm1370, %v1066, %v1498
        %v1627 = vsel %vm1371, %v1071, %v1499
        %v1628 = vsel %vm1372, %v1074, %v1500
        %v1629 = vsel %vm1373, %v1079, %v1501
        %v1630 = vsel %vm1374, %v1082, %v1502
        %v1631 = vsel %vm1375, %v1087, %v1503
        %v1632 = vsel %vm1376, %v1090, %v1504
        %v1633 = vsel %vm1377, %v1095, %v1505
        %v1634 = vsel %vm1378, %v1098, %v1506
        %v1635 = vsel %vm1379, %v1103, %v1507
        %v1636 = vsel %vm1380, %v1106, %v1508
        %v1637 = vsel %vm1381, %v1111, %v1509
        %v1638 = vsel %vm1382, %v1114, %v1510
        %v1639 = vsel %vm1383, %v1119, %v1511
        %v1640 = vsel %vm1384, %v1122, %v1512
        %v1641 = vsel %vm1385, %v1127, %v1513
        %v1642 = vsel %vm1386, %v1130, %v1514
        %v1643 = vsel %vm1387, %v1135, %v1515
        %v1644 = vsel %vm1388, %v1138, %v1516
        %v1645 = vsel %vm1389, %v1143, %v1517
        %v1646 = vsel %vm1390, %v1146, %v1518
        %v1647 = vsel %vm1391, %v1151, %v1519
        %v1648 = vsel %vm1392, %v1154, %v1520
        %v1649 = vsel %vm1393, %v1159, %v1521
        %v1650 = vsel %vm1394, %v1162, %v1522
        %v1651 = vsel %vm1395, %v1167, %v1523
        %v1652 = vsel %vm1396, %v1170, %v1524
        %v1653 = vsel %vm1397, %v1175, %v1525
        %v1654 = vsel %vm1398, %v1178, %v1526
        %v1655 = vsel %vm1399, %v1183, %v1527
        %v1656 = vsel %vm1400, %v1186, %v1528
        %v1657 = vsel %vm1401, %v1191, %v1529
        %v1658 = vsel %vm1402, %v1194, %v1530
        %v1659 = vsel %vm1403, %v1199, %v1531
        %v1660 = vsel %vm1404, %v1202, %v1532
        %v1661 = vsel %vm1405, %v1207, %v1533
        %v1662 = vsel %vm1406, %v1210, %v1534
        %v1663 = vsel %vm1407, %v1215, %v1535
        %v1664 = vsel %vm1408, %v1218, %v1536
        %v1665 = vsel %vm1409, %v1223, %v1537
        %v1666 = vsel %vm1410, %v1226, %v1538
        %v1667 = vsel %vm1411, %v1231, %v1539
        %v1668 = vsel %vm1412, %v1234, %v1540
        %v1669 = vsel %vm1413, %v1239, %v1541
        %v1670 = vsel %vm1414, %v1242, %v1542
        %v1671 = vsel %vm1415, %v1247, %v1543
        %v1672 = vsel %vm1416, %v1250, %v1544
        %v1673 = vsel %vm1417, %v1255, %v1545
        %v1674 = vsel %vm1418, %v1258, %v1546
        %v1675 = vsel %vm1419, %v1263, %v1547
        %v1676 = vsel %vm1420, %v1266, %v1548
        %v1677 = vsel %vm1421, %v1271, %v1549
        %v1678 = vsel %vm1422, %v1274, %v1550
        %v1679 = vsel %vm1423, %v1279, %v1551
        %v1680 = vsel %vm1424, %v1282, %v1552
        %v1681 = vsel %vm1425, %v1287, %v1553
        %v1682 = vsel %vm1426, %v1290, %v1554
        %v1683 = vsel %vm1427, %v1295, %v1555
        %v1684 = vsel %vm1428, %v1298, %v1556
        %v1685 = vpack.c.bf16 %v1558, %v1557
        %v1686 = vpack.c.bf16 %v1560, %v1559
        %v1687 = vpack.c.bf16 %v1562, %v1561
        %v1688 = vpack.c.bf16 %v1564, %v1563
        %v1689 = vpack.c.bf16 %v1566, %v1565
        %v1690 = vpack.c.bf16 %v1568, %v1567
        %v1691 = vpack.c.bf16 %v1570, %v1569
        %v1692 = vpack.c.bf16 %v1572, %v1571
        %v1693 = vpack.c.bf16 %v1574, %v1573
        %v1694 = vpack.c.bf16 %v1576, %v1575
        %v1695 = vpack.c.bf16 %v1578, %v1577
        %v1696 = vpack.c.bf16 %v1580, %v1579
        %v1697 = vpack.c.bf16 %v1582, %v1581
        %v1698 = vpack.c.bf16 %v1584, %v1583
        %v1699 = vpack.c.bf16 %v1586, %v1585
        %v1700 = vpack.c.bf16 %v1588, %v1587
        %v1701 = vpack.c.bf16 %v1590, %v1589
        %v1702 = vpack.c.bf16 %v1592, %v1591
        %v1703 = vpack.c.bf16 %v1594, %v1593
        %v1704 = vpack.c.bf16 %v1596, %v1595
        %v1705 = vpack.c.bf16 %v1598, %v1597
        %v1706 = vpack.c.bf16 %v1600, %v1599
        %v1707 = vpack.c.bf16 %v1602, %v1601
        %v1708 = vpack.c.bf16 %v1604, %v1603
        %v1709 = vpack.c.bf16 %v1606, %v1605
        %v1710 = vpack.c.bf16 %v1608, %v1607
        %v1711 = vpack.c.bf16 %v1610, %v1609
        %v1712 = vpack.c.bf16 %v1612, %v1611
        %v1713 = vpack.c.bf16 %v1614, %v1613
        %v1714 = vpack.c.bf16 %v1616, %v1615
        %v1715 = vpack.c.bf16 %v1618, %v1617
        %v1716 = vpack.c.bf16 %v1620, %v1619
        %v1717 = vpack.c.bf16 %v1622, %v1621
        %v1718 = vpack.c.bf16 %v1624, %v1623
        %v1719 = vpack.c.bf16 %v1626, %v1625
        %v1720 = vpack.c.bf16 %v1628, %v1627
        %v1721 = vpack.c.bf16 %v1630, %v1629
        %v1722 = vpack.c.bf16 %v1632, %v1631
        %v1723 = vpack.c.bf16 %v1634, %v1633
        %v1724 = vpack.c.bf16 %v1636, %v1635
        %v1725 = vpack.c.bf16 %v1638, %v1637
        %v1726 = vpack.c.bf16 %v1640, %v1639
        %v1727 = vpack.c.bf16 %v1642, %v1641
        %v1728 = vpack.c.bf16 %v1644, %v1643
        %v1729 = vpack.c.bf16 %v1646, %v1645
        %v1730 = vpack.c.bf16 %v1648, %v1647
        %v1731 = vpack.c.bf16 %v1650, %v1649
        %v1732 = vpack.c.bf16 %v1652, %v1651
        %v1733 = vpack.c.bf16 %v1654, %v1653
        %v1734 = vpack.c.bf16 %v1656, %v1655
        %v1735 = vpack.c.bf16 %v1658, %v1657
        %v1736 = vpack.c.bf16 %v1660, %v1659
        %v1737 = vpack.c.bf16 %v1662, %v1661
        %v1738 = vpack.c.bf16 %v1664, %v1663
        %v1739 = vpack.c.bf16 %v1666, %v1665
        %v1740 = vpack.c.bf16 %v1668, %v1667
        %v1741 = vpack.c.bf16 %v1670, %v1669
        %v1742 = vpack.c.bf16 %v1672, %v1671
        %v1743 = vpack.c.bf16 %v1674, %v1673
        %v1744 = vpack.c.bf16 %v1676, %v1675
        %v1745 = vpack.c.bf16 %v1678, %v1677
        %v1746 = vpack.c.bf16 %v1680, %v1679
        %v1747 = vpack.c.bf16 %v1682, %v1681
        %v1748 = vpack.c.bf16 %v1684, %v1683
        %v1813 = vunpack.c.l.b16 %v1685
        %v1814 = vunpack.c.h.b16 %v1685
        %v1815 = vunpack.c.l.b16 %v1686
        %v1816 = vunpack.c.h.b16 %v1686
        %v1817 = vunpack.c.l.b16 %v1687
        %v1818 = vunpack.c.h.b16 %v1687
        %v1819 = vunpack.c.l.b16 %v1688
        %v1820 = vunpack.c.h.b16 %v1688
        %v1821 = vunpack.c.l.b16 %v1689
        %v1822 = vunpack.c.h.b16 %v1689
        %v1823 = vunpack.c.l.b16 %v1690
        %v1824 = vunpack.c.h.b16 %v1690
        %v1825 = vunpack.c.l.b16 %v1691
        %v1826 = vunpack.c.h.b16 %v1691
        %v1827 = vunpack.c.l.b16 %v1692
        %v1828 = vunpack.c.h.b16 %v1692
        %v1829 = vunpack.c.l.b16 %v1693
        %v1830 = vunpack.c.h.b16 %v1693
        %v1831 = vunpack.c.l.b16 %v1694
        %v1832 = vunpack.c.h.b16 %v1694
        %v1833 = vunpack.c.l.b16 %v1695
        %v1834 = vunpack.c.h.b16 %v1695
        %v1835 = vunpack.c.l.b16 %v1696
        %v1836 = vunpack.c.h.b16 %v1696
        %v1837 = vunpack.c.l.b16 %v1697
        %v1838 = vunpack.c.h.b16 %v1697
        %v1839 = vunpack.c.l.b16 %v1698
        %v1840 = vunpack.c.h.b16 %v1698
        %v1841 = vunpack.c.l.b16 %v1699
        %v1842 = vunpack.c.h.b16 %v1699
        %v1843 = vunpack.c.l.b16 %v1700
        %v1844 = vunpack.c.h.b16 %v1700
        %v1845 = vunpack.c.l.b16 %v1701
        %v1846 = vunpack.c.h.b16 %v1701
        %v1847 = vunpack.c.l.b16 %v1702
        %v1848 = vunpack.c.h.b16 %v1702
        %v1849 = vunpack.c.l.b16 %v1703
        %v1850 = vunpack.c.h.b16 %v1703
        %v1851 = vunpack.c.l.b16 %v1704
        %v1852 = vunpack.c.h.b16 %v1704
        %v1853 = vunpack.c.l.b16 %v1705
        %v1854 = vunpack.c.h.b16 %v1705
        %v1855 = vunpack.c.l.b16 %v1706
        %v1856 = vunpack.c.h.b16 %v1706
        %v1857 = vunpack.c.l.b16 %v1707
        %v1858 = vunpack.c.h.b16 %v1707
        %v1859 = vunpack.c.l.b16 %v1708
        %v1860 = vunpack.c.h.b16 %v1708
        %v1861 = vunpack.c.l.b16 %v1709
        %v1862 = vunpack.c.h.b16 %v1709
        %v1863 = vunpack.c.l.b16 %v1710
        %v1864 = vunpack.c.h.b16 %v1710
        %v1865 = vunpack.c.l.b16 %v1711
        %v1866 = vunpack.c.h.b16 %v1711
        %v1867 = vunpack.c.l.b16 %v1712
        %v1868 = vunpack.c.h.b16 %v1712
        %v1869 = vunpack.c.l.b16 %v1713
        %v1870 = vunpack.c.h.b16 %v1713
        %v1871 = vunpack.c.l.b16 %v1714
        %v1872 = vunpack.c.h.b16 %v1714
        %v1873 = vunpack.c.l.b16 %v1715
        %v1874 = vunpack.c.h.b16 %v1715
        %v1875 = vunpack.c.l.b16 %v1716
        %v1876 = vunpack.c.h.b16 %v1716
        %v1877 = vunpack.c.l.b16 %v1717
        %v1878 = vunpack.c.h.b16 %v1717
        %v1879 = vunpack.c.l.b16 %v1718
        %v1880 = vunpack.c.h.b16 %v1718
        %v1881 = vunpack.c.l.b16 %v1719
        %v1882 = vunpack.c.h.b16 %v1719
        %v1883 = vunpack.c.l.b16 %v1720
        %v1884 = vunpack.c.h.b16 %v1720
        %v1885 = vunpack.c.l.b16 %v1721
        %v1886 = vunpack.c.h.b16 %v1721
        %v1887 = vunpack.c.l.b16 %v1722
        %v1888 = vunpack.c.h.b16 %v1722
        %v1889 = vunpack.c.l.b16 %v1723
        %v1890 = vunpack.c.h.b16 %v1723
        %v1891 = vunpack.c.l.b16 %v1724
        %v1892 = vunpack.c.h.b16 %v1724
        %v1893 = vunpack.c.l.b16 %v1725
        %v1894 = vunpack.c.h.b16 %v1725
        %v1895 = vunpack.c.l.b16 %v1726
        %v1896 = vunpack.c.h.b16 %v1726
        %v1897 = vunpack.c.l.b16 %v1727
        %v1898 = vunpack.c.h.b16 %v1727
        %v1899 = vunpack.c.l.b16 %v1728
        %v1900 = vunpack.c.h.b16 %v1728
        %v1901 = vunpack.c.l.b16 %v1729
        %v1902 = vunpack.c.h.b16 %v1729
        %v1903 = vunpack.c.l.b16 %v1730
        %v1904 = vunpack.c.h.b16 %v1730
        %v1905 = vunpack.c.l.b16 %v1731
        %v1906 = vunpack.c.h.b16 %v1731
        %v1907 = vunpack.c.l.b16 %v1732
        %v1908 = vunpack.c.h.b16 %v1732
        %v1909 = vunpack.c.l.b16 %v1733
        %v1910 = vunpack.c.h.b16 %v1733
        %v1911 = vunpack.c.l.b16 %v1734
        %v1912 = vunpack.c.h.b16 %v1734
        %v1913 = vunpack.c.l.b16 %v1735
        %v1914 = vunpack.c.h.b16 %v1735
        %v1915 = vunpack.c.l.b16 %v1736
        %v1916 = vunpack.c.h.b16 %v1736
        %v1917 = vunpack.c.l.b16 %v1737
        %v1918 = vunpack.c.h.b16 %v1737
        %v1919 = vunpack.c.l.b16 %v1738
        %v1920 = vunpack.c.h.b16 %v1738
        %v1921 = vunpack.c.l.b16 %v1739
        %v1922 = vunpack.c.h.b16 %v1739
        %v1923 = vunpack.c.l.b16 %v1740
        %v1924 = vunpack.c.h.b16 %v1740
        %v1925 = vunpack.c.l.b16 %v1741
        %v1926 = vunpack.c.h.b16 %v1741
        %v1927 = vunpack.c.l.b16 %v1742
        %v1928 = vunpack.c.h.b16 %v1742
        %v1929 = vunpack.c.l.b16 %v1743
        %v1930 = vunpack.c.h.b16 %v1743
        %v1931 = vunpack.c.l.b16 %v1744
        %v1932 = vunpack.c.h.b16 %v1744
        %v1933 = vunpack.c.l.b16 %v1745
        %v1934 = vunpack.c.h.b16 %v1745
        %v1935 = vunpack.c.l.b16 %v1746
        %v1936 = vunpack.c.h.b16 %v1746
        %v1937 = vunpack.c.l.b16 %v1747
        %v1938 = vunpack.c.h.b16 %v1747
        %v1939 = vunpack.c.l.b16 %v1748
        %v1940 = vunpack.c.h.b16 %v1748
        %v1941 = vpack.c.b16 %v1813, %v1813
        %v1942 = vpack.c.b16 %v1814, %v1814
        %v1943 = vpack.c.b16 %v1815, %v1815
        %v1944 = vpack.c.b16 %v1816, %v1816
        %v1945 = vpack.c.b16 %v1817, %v1817
        %v1946 = vpack.c.b16 %v1818, %v1818
        %v1947 = vpack.c.b16 %v1819, %v1819
        %v1948 = vpack.c.b16 %v1820, %v1820
        %v1949 = vpack.c.b16 %v1821, %v1821
        %v1950 = vpack.c.b16 %v1822, %v1822
        %v1951 = vpack.c.b16 %v1823, %v1823
        %v1952 = vpack.c.b16 %v1824, %v1824
        %v1953 = vpack.c.b16 %v1825, %v1825
        %v1954 = vpack.c.b16 %v1826, %v1826
        %v1955 = vpack.c.b16 %v1827, %v1827
        %v1956 = vpack.c.b16 %v1828, %v1828
        %v1957 = vpack.c.b16 %v1829, %v1829
        %v1958 = vpack.c.b16 %v1830, %v1830
        %v1959 = vpack.c.b16 %v1831, %v1831
        %v1960 = vpack.c.b16 %v1832, %v1832
        %v1961 = vpack.c.b16 %v1833, %v1833
        %v1962 = vpack.c.b16 %v1834, %v1834
        %v1963 = vpack.c.b16 %v1835, %v1835
        %v1964 = vpack.c.b16 %v1836, %v1836
        %v1965 = vpack.c.b16 %v1837, %v1837
        %v1966 = vpack.c.b16 %v1838, %v1838
        %v1967 = vpack.c.b16 %v1839, %v1839
        %v1968 = vpack.c.b16 %v1840, %v1840
        %v1969 = vpack.c.b16 %v1841, %v1841
        %v1970 = vpack.c.b16 %v1842, %v1842
        %v1971 = vpack.c.b16 %v1843, %v1843
        %v1972 = vpack.c.b16 %v1844, %v1844
        %v1973 = vpack.c.b16 %v1845, %v1845
        %v1974 = vpack.c.b16 %v1846, %v1846
        %v1975 = vpack.c.b16 %v1847, %v1847
        %v1976 = vpack.c.b16 %v1848, %v1848
        %v1977 = vpack.c.b16 %v1849, %v1849
        %v1978 = vpack.c.b16 %v1850, %v1850
        %v1979 = vpack.c.b16 %v1851, %v1851
        %v1980 = vpack.c.b16 %v1852, %v1852
        %v1981 = vpack.c.b16 %v1853, %v1853
        %v1982 = vpack.c.b16 %v1854, %v1854
        %v1983 = vpack.c.b16 %v1855, %v1855
        %v1984 = vpack.c.b16 %v1856, %v1856
        %v1985 = vpack.c.b16 %v1857, %v1857
        %v1986 = vpack.c.b16 %v1858, %v1858
        %v1987 = vpack.c.b16 %v1859, %v1859
        %v1988 = vpack.c.b16 %v1860, %v1860
        %v1989 = vpack.c.b16 %v1861, %v1861
        %v1990 = vpack.c.b16 %v1862, %v1862
        %v1991 = vpack.c.b16 %v1863, %v1863
        %v1992 = vpack.c.b16 %v1864, %v1864
        %v1993 = vpack.c.b16 %v1865, %v1865
        %v1994 = vpack.c.b16 %v1866, %v1866
        %v1995 = vpack.c.b16 %v1867, %v1867
        %v1996 = vpack.c.b16 %v1868, %v1868
        %v1997 = vpack.c.b16 %v1869, %v1869
        %v1998 = vpack.c.b16 %v1870, %v1870
        %v1999 = vpack.c.b16 %v1871, %v1871
        %v2000 = vpack.c.b16 %v1872, %v1872
        %v2001 = vpack.c.b16 %v1873, %v1873
        %v2002 = vpack.c.b16 %v1874, %v1874
        %v2003 = vpack.c.b16 %v1875, %v1875
        %v2004 = vpack.c.b16 %v1876, %v1876
        %v2005 = vpack.c.b16 %v1877, %v1877
        %v2006 = vpack.c.b16 %v1878, %v1878
        %v2007 = vpack.c.b16 %v1879, %v1879
        %v2008 = vpack.c.b16 %v1880, %v1880
        %v2009 = vpack.c.b16 %v1881, %v1881
        %v2010 = vpack.c.b16 %v1882, %v1882
        %v2011 = vpack.c.b16 %v1883, %v1883
        %v2012 = vpack.c.b16 %v1884, %v1884
        %v2013 = vpack.c.b16 %v1885, %v1885
        %v2014 = vpack.c.b16 %v1886, %v1886
        %v2015 = vpack.c.b16 %v1887, %v1887
        %v2016 = vpack.c.b16 %v1888, %v1888
        %v2017 = vpack.c.b16 %v1889, %v1889
        %v2018 = vpack.c.b16 %v1890, %v1890
        %v2019 = vpack.c.b16 %v1891, %v1891
        %v2020 = vpack.c.b16 %v1892, %v1892
        %v2021 = vpack.c.b16 %v1893, %v1893
        %v2022 = vpack.c.b16 %v1894, %v1894
        %v2023 = vpack.c.b16 %v1895, %v1895
        %v2024 = vpack.c.b16 %v1896, %v1896
        %v2025 = vpack.c.b16 %v1897, %v1897
        %v2026 = vpack.c.b16 %v1898, %v1898
        %v2027 = vpack.c.b16 %v1899, %v1899
        %v2028 = vpack.c.b16 %v1900, %v1900
        %v2029 = vpack.c.b16 %v1901, %v1901
        %v2030 = vpack.c.b16 %v1902, %v1902
        %v2031 = vpack.c.b16 %v1903, %v1903
        %v2032 = vpack.c.b16 %v1904, %v1904
        %v2033 = vpack.c.b16 %v1905, %v1905
        %v2034 = vpack.c.b16 %v1906, %v1906
        %v2035 = vpack.c.b16 %v1907, %v1907
        %v2036 = vpack.c.b16 %v1908, %v1908
        %v2037 = vpack.c.b16 %v1909, %v1909
        %v2038 = vpack.c.b16 %v1910, %v1910
        %v2039 = vpack.c.b16 %v1911, %v1911
        %v2040 = vpack.c.b16 %v1912, %v1912
        %v2041 = vpack.c.b16 %v1913, %v1913
        %v2042 = vpack.c.b16 %v1914, %v1914
        %v2043 = vpack.c.b16 %v1915, %v1915
        %v2044 = vpack.c.b16 %v1916, %v1916
        %v2045 = vpack.c.b16 %v1917, %v1917
        %v2046 = vpack.c.b16 %v1918, %v1918
        %v2047 = vpack.c.b16 %v1919, %v1919
        %v2048 = vpack.c.b16 %v1920, %v1920
        %v2049 = vpack.c.b16 %v1921, %v1921
        %v2050 = vpack.c.b16 %v1922, %v1922
        %v2051 = vpack.c.b16 %v1923, %v1923
        %v2052 = vpack.c.b16 %v1924, %v1924
        %v2053 = vpack.c.b16 %v1925, %v1925
        %v2054 = vpack.c.b16 %v1926, %v1926
        %v2055 = vpack.c.b16 %v1927, %v1927
        %v2056 = vpack.c.b16 %v1928, %v1928
        %v2057 = vpack.c.b16 %v1929, %v1929
        %v2058 = vpack.c.b16 %v1930, %v1930
        %v2059 = vpack.c.b16 %v1931, %v1931
        %v2060 = vpack.c.b16 %v1932, %v1932
        %v2061 = vpack.c.b16 %v1933, %v1933
        %v2062 = vpack.c.b16 %v1934, %v1934
        %v2063 = vpack.c.b16 %v1935, %v1935
        %v2064 = vpack.c.b16 %v1936, %v1936
        %v2065 = vpack.c.b16 %v1937, %v1937
        %v2066 = vpack.c.b16 %v1938, %v1938
        %v2067 = vpack.c.b16 %v1939, %v1939
        %v2068 = vpack.c.b16 %v1940, %v1940
        %2197 = vst [vmem:[%s176] sm:$0xf] %v1941
        %2198 = vst [vmem:[%s176 + $0x4] sm:$0xf] %v1942
        %2199 = vst [vmem:[%s176 + $0x8] sm:$0xf] %v1943
        %2200 = vst [vmem:[%s176 + $0xc] sm:$0xf] %v1944
        %2201 = vst [vmem:[%s176 + $0x10] sm:$0xf] %v1945
        %2202 = vst [vmem:[%s176 + $0x14] sm:$0xf] %v1946
        %2203 = vst [vmem:[%s176 + $0x18] sm:$0xf] %v1947
        %2204 = vst [vmem:[%s176 + $0x1c] sm:$0xf] %v1948
        %2205 = vst [vmem:[%s176 + $0x20] sm:$0xf] %v1949
        %2206 = vst [vmem:[%s176 + $0x24] sm:$0xf] %v1950
        %2207 = vst [vmem:[%s176 + $0x28] sm:$0xf] %v1951
        %2208 = vst [vmem:[%s176 + $0x2c] sm:$0xf] %v1952
        %2209 = vst [vmem:[%s176 + $0x30] sm:$0xf] %v1953
        %2210 = vst [vmem:[%s176 + $0x34] sm:$0xf] %v1954
        %2211 = vst [vmem:[%s176 + $0x38] sm:$0xf] %v1955
        %2212 = vst [vmem:[%s176 + $0x3c] sm:$0xf] %v1956
        %2213 = vst [vmem:[%s176 + $0x40] sm:$0xf] %v1957
        %2214 = vst [vmem:[%s176 + $0x44] sm:$0xf] %v1958
        %2215 = vst [vmem:[%s176 + $0x48] sm:$0xf] %v1959
        %2216 = vst [vmem:[%s176 + $0x4c] sm:$0xf] %v1960
        %2217 = vst [vmem:[%s176 + $0x50] sm:$0xf] %v1961
        %2218 = vst [vmem:[%s176 + $0x54] sm:$0xf] %v1962
        %2219 = vst [vmem:[%s176 + $0x58] sm:$0xf] %v1963
        %2220 = vst [vmem:[%s176 + $0x5c] sm:$0xf] %v1964
        %2221 = vst [vmem:[%s176 + $0x60] sm:$0xf] %v1965
        %2222 = vst [vmem:[%s176 + $0x64] sm:$0xf] %v1966
        %2223 = vst [vmem:[%s176 + $0x68] sm:$0xf] %v1967
        %2224 = vst [vmem:[%s176 + $0x6c] sm:$0xf] %v1968
        %2225 = vst [vmem:[%s176 + $0x70] sm:$0xf] %v1969
        %2226 = vst [vmem:[%s176 + $0x74] sm:$0xf] %v1970
        %2227 = vst [vmem:[%s176 + $0x78] sm:$0xf] %v1971
        %2228 = vst [vmem:[%s176 + $0x7c] sm:$0xf] %v1972
        %2229 = vst [vmem:[%s176 + $0x80] sm:$0xf] %v1973
        %2230 = vst [vmem:[%s176 + $0x84] sm:$0xf] %v1974
        %2231 = vst [vmem:[%s176 + $0x88] sm:$0xf] %v1975
        %2232 = vst [vmem:[%s176 + $0x8c] sm:$0xf] %v1976
        %2233 = vst [vmem:[%s176 + $0x90] sm:$0xf] %v1977
        %2234 = vst [vmem:[%s176 + $0x94] sm:$0xf] %v1978
        %2235 = vst [vmem:[%s176 + $0x98] sm:$0xf] %v1979
        %2236 = vst [vmem:[%s176 + $0x9c] sm:$0xf] %v1980
        %2237 = vst [vmem:[%s176 + $0xa0] sm:$0xf] %v1981
        %2238 = vst [vmem:[%s176 + $0xa4] sm:$0xf] %v1982
        %2239 = vst [vmem:[%s176 + $0xa8] sm:$0xf] %v1983
        %2240 = vst [vmem:[%s176 + $0xac] sm:$0xf] %v1984
        %2241 = vst [vmem:[%s176 + $0xb0] sm:$0xf] %v1985
        %2242 = vst [vmem:[%s176 + $0xb4] sm:$0xf] %v1986
        %2243 = vst [vmem:[%s176 + $0xb8] sm:$0xf] %v1987
        %2244 = vst [vmem:[%s176 + $0xbc] sm:$0xf] %v1988
        %2245 = vst [vmem:[%s176 + $0xc0] sm:$0xf] %v1989
        %2246 = vst [vmem:[%s176 + $0xc4] sm:$0xf] %v1990
        %2247 = vst [vmem:[%s176 + $0xc8] sm:$0xf] %v1991
        %2248 = vst [vmem:[%s176 + $0xcc] sm:$0xf] %v1992
        %2249 = vst [vmem:[%s176 + $0xd0] sm:$0xf] %v1993
        %2250 = vst [vmem:[%s176 + $0xd4] sm:$0xf] %v1994
        %2251 = vst [vmem:[%s176 + $0xd8] sm:$0xf] %v1995
        %2252 = vst [vmem:[%s176 + $0xdc] sm:$0xf] %v1996
        %2253 = vst [vmem:[%s176 + $0xe0] sm:$0xf] %v1997
        %2254 = vst [vmem:[%s176 + $0xe4] sm:$0xf] %v1998
        %2255 = vst [vmem:[%s176 + $0xe8] sm:$0xf] %v1999
        %2256 = vst [vmem:[%s176 + $0xec] sm:$0xf] %v2000
        %2257 = vst [vmem:[%s176 + $0xf0] sm:$0xf] %v2001
        %2258 = vst [vmem:[%s176 + $0xf4] sm:$0xf] %v2002
        %2259 = vst [vmem:[%s176 + $0xf8] sm:$0xf] %v2003
        %2260 = vst [vmem:[%s176 + $0xfc] sm:$0xf] %v2004
        %2261 = vst [vmem:[%s176 + $0x100] sm:$0xf] %v2005
        %2262 = vst [vmem:[%s176 + $0x104] sm:$0xf] %v2006
        %2263 = vst [vmem:[%s176 + $0x108] sm:$0xf] %v2007
        %2264 = vst [vmem:[%s176 + $0x10c] sm:$0xf] %v2008
        %2265 = vst [vmem:[%s176 + $0x110] sm:$0xf] %v2009
        %2266 = vst [vmem:[%s176 + $0x114] sm:$0xf] %v2010
        %2267 = vst [vmem:[%s176 + $0x118] sm:$0xf] %v2011
        %2268 = vst [vmem:[%s176 + $0x11c] sm:$0xf] %v2012
        %2269 = vst [vmem:[%s176 + $0x120] sm:$0xf] %v2013
        %2270 = vst [vmem:[%s176 + $0x124] sm:$0xf] %v2014
        %2271 = vst [vmem:[%s176 + $0x128] sm:$0xf] %v2015
        %2272 = vst [vmem:[%s176 + $0x12c] sm:$0xf] %v2016
        %2273 = vst [vmem:[%s176 + $0x130] sm:$0xf] %v2017
        %2274 = vst [vmem:[%s176 + $0x134] sm:$0xf] %v2018
        %2275 = vst [vmem:[%s176 + $0x138] sm:$0xf] %v2019
        %2276 = vst [vmem:[%s176 + $0x13c] sm:$0xf] %v2020
        %2277 = vst [vmem:[%s176 + $0x140] sm:$0xf] %v2021
        %2278 = vst [vmem:[%s176 + $0x144] sm:$0xf] %v2022
        %2279 = vst [vmem:[%s176 + $0x148] sm:$0xf] %v2023
        %2280 = vst [vmem:[%s176 + $0x14c] sm:$0xf] %v2024
        %2281 = vst [vmem:[%s176 + $0x150] sm:$0xf] %v2025
        %2282 = vst [vmem:[%s176 + $0x154] sm:$0xf] %v2026
        %2283 = vst [vmem:[%s176 + $0x158] sm:$0xf] %v2027
        %2284 = vst [vmem:[%s176 + $0x15c] sm:$0xf] %v2028
        %2285 = vst [vmem:[%s176 + $0x160] sm:$0xf] %v2029
        %2286 = vst [vmem:[%s176 + $0x164] sm:$0xf] %v2030
        %2287 = vst [vmem:[%s176 + $0x168] sm:$0xf] %v2031
        %2288 = vst [vmem:[%s176 + $0x16c] sm:$0xf] %v2032
        %2289 = vst [vmem:[%s176 + $0x170] sm:$0xf] %v2033
        %2290 = vst [vmem:[%s176 + $0x174] sm:$0xf] %v2034
        %2291 = vst [vmem:[%s176 + $0x178] sm:$0xf] %v2035
        %2292 = vst [vmem:[%s176 + $0x17c] sm:$0xf] %v2036
        %2293 = vst [vmem:[%s176 + $0x180] sm:$0xf] %v2037
        %2294 = vst [vmem:[%s176 + $0x184] sm:$0xf] %v2038
        %2295 = vst [vmem:[%s176 + $0x188] sm:$0xf] %v2039
        %2296 = vst [vmem:[%s176 + $0x18c] sm:$0xf] %v2040
        %2297 = vst [vmem:[%s176 + $0x190] sm:$0xf] %v2041
        %2298 = vst [vmem:[%s176 + $0x194] sm:$0xf] %v2042
        %2299 = vst [vmem:[%s176 + $0x198] sm:$0xf] %v2043
        %2300 = vst [vmem:[%s176 + $0x19c] sm:$0xf] %v2044
        %2301 = vst [vmem:[%s176 + $0x1a0] sm:$0xf] %v2045
        %2302 = vst [vmem:[%s176 + $0x1a4] sm:$0xf] %v2046
        %2303 = vst [vmem:[%s176 + $0x1a8] sm:$0xf] %v2047
        %2304 = vst [vmem:[%s176 + $0x1ac] sm:$0xf] %v2048
        %2305 = vst [vmem:[%s176 + $0x1b0] sm:$0xf] %v2049
        %2306 = vst [vmem:[%s176 + $0x1b4] sm:$0xf] %v2050
        %2307 = vst [vmem:[%s176 + $0x1b8] sm:$0xf] %v2051
        %2308 = vst [vmem:[%s176 + $0x1bc] sm:$0xf] %v2052
        %2309 = vst [vmem:[%s176 + $0x1c0] sm:$0xf] %v2053
        %2310 = vst [vmem:[%s176 + $0x1c4] sm:$0xf] %v2054
        %2311 = vst [vmem:[%s176 + $0x1c8] sm:$0xf] %v2055
        %2312 = vst [vmem:[%s176 + $0x1cc] sm:$0xf] %v2056
        %2313 = vst [vmem:[%s176 + $0x1d0] sm:$0xf] %v2057
        %2314 = vst [vmem:[%s176 + $0x1d4] sm:$0xf] %v2058
        %2315 = vst [vmem:[%s176 + $0x1d8] sm:$0xf] %v2059
        %2316 = vst [vmem:[%s176 + $0x1dc] sm:$0xf] %v2060
        %2317 = vst [vmem:[%s176 + $0x1e0] sm:$0xf] %v2061
        %2318 = vst [vmem:[%s176 + $0x1e4] sm:$0xf] %v2062
        %2319 = vst [vmem:[%s176 + $0x1e8] sm:$0xf] %v2063
        %2320 = vst [vmem:[%s176 + $0x1ec] sm:$0xf] %v2064
        %2321 = vst [vmem:[%s176 + $0x1f0] sm:$0xf] %v2065
        %2322 = vst [vmem:[%s176 + $0x1f4] sm:$0xf] %v2066
        %2323 = vst [vmem:[%s176 + $0x1f8] sm:$0xf] %v2067
        %2324 = vst [vmem:[%s176 + $0x1fc] sm:$0xf] %v2068
        %s2325 = sand.u32 %s75, 1
        %s2326 = scalar_lea.sflag [#allocation4], %s2325
        %s2327 = sand.u32 %s75, 1
        %s2328 = smul.addr %s2327, 512
        %s2329 = scalar_lea.vmem [#allocation7], %s2328
        // Predicated region
        $region37: #{tpu_custom_call.1} parent=27 // pred_check
          %p2330 = pneg %p85
        $region38: #{tpu_custom_call.1} parent=27 // pred_check_branch
          %2332 = sbr.rel (%p2330) target = $region40
        $region39: #{tpu_custom_call.1} parent=27 // pred_region
          %s2333 = smul.u32 128, %s20
          %s2335 = ssub.s32 8192, 8192
          %2336 = vsyncadd %s2326, %s2335
          %s2337 = smul.addr %s2333, 64
          %s2338 = scalar_lea.hbm %s2, %s2337
          %s2339 = sshll.u32 %s2329, 4
          %s2340 = int_to_ptr.vmem [resolvable:$true] %s2339
          %2345 = dma.vmem_to_hbm [thread:$0]  %s2340, 8192, %s2338, %s2326, 64, 64, 4
        $region40: #{tpu_custom_call.1} parent=27 // pred_fallthru
          _
      $region28: #{tpu_custom_call.1} parent=5 // pred_fallthru
        _
      %p2346 = scmp.le.s32.totalorder 2, %s15
      // Predicated region
      $region41: #{tpu_custom_call.1} parent=5 // pred_check
        %p2347 = pneg %p2346
      $region42: #{tpu_custom_call.1} parent=5 // pred_check_branch
        %2349 = sbr.rel (%p2347) target = $region44
      $region43: #{tpu_custom_call.1} parent=5 // pred_region
        %s2350 = ssub.s32 %s15, 2
        // Predicated region
        $region45: #{tpu_custom_call.1} parent=43 // pred_check
          %p2351 = pneg %p91
        $region46: #{tpu_custom_call.1} parent=43 // pred_check_branch
          %2353 = sbr.rel (%p2351) target = $region48
        $region47: #{tpu_custom_call.1} parent=43 // pred_region
          %s2354 = sand.u32 %s76, 1
          %s2355 = scalar_lea.sflag [#allocation4], %s2354
          %s2356 = sand.u32 %s76, 1
          %s2357 = smul.addr %s2356, 512
          %s2358 = scalar_lea.vmem [#allocation7], %s2357
          %2359 = dma.done %s2355, 8192
        $region48: #{tpu_custom_call.1} parent=43 // pred_fallthru
          _
      $region44: #{tpu_custom_call.1} parent=5 // pred_fallthru
        _
    $region6: #{tpu_custom_call.1} parent=1 // loop_footer
      %s19 = sadd.s32 1, %s15
    $region7: #{tpu_custom_call.1} parent=1 // loop_footer_branch
      %14 = sbr.rel target = $region3
    $region8: #{tpu_custom_call.1} parent=1 // loop_exit
      _
    %2360 = vsyncpa [#allocation3], 1
    %s2361 = scalar_lea.sflag [#allocation3], 1
    %2362 = vsyncpa %s2361, 1
    %2363 = vsyncpa [#allocation6], 1
    %2364 = vsyncpa [#allocation4], 1
    %s2365 = scalar_lea.sflag [#allocation4], 1
    %2366 = vsyncpa %s2365, 1

</llo_original>
